<compile_context>
chip_gen: v6e
topology: v6e:2x2x1
jax: 0.10.0
libtpu: 0.0.40
codegen_flags: <defaults>
</compile_context>

<pallas_src>
import functools

import jax
import jax.numpy as jnp
from jax import lax
from jax.experimental import pallas as pl
from jax.experimental.pallas import tpu as pltpu


def conv_same_pad(ksize, stride):
    """Mirror of Conv2dSame.conv_same_pad, normalized to (left, right)."""
    if (ksize - stride) % 2 == 0:
        p = (ksize - stride) // 2
        return (p, p)
    left = (ksize - stride) // 2
    return (left, left + 1)


def _round_up(x, m):
    return (x + m - 1) // m * m


def _conv2d_im2col_kernel(x_ref, w_ref, b_ref, o_ref, patch_ref, *,
                          KH, KW, S, Cin, Wq, Lout):
    # x_ref:     (S*S, Cin, Lpad)  flattened zero-padded phase planes (1 batch)
    # w_ref:     (Cout, K)         K = KH*KW*Cin, resident across the grid
    # b_ref:     (Cout, 1)
    # o_ref:     (Cout, Lout)      Lout = Ho*Wq   (spatial dim on lanes)
    # patch_ref: (K, Lout)         VMEM scratch: im2col patch matrix
    for kh in range(KH):
        for kw in range(KW):
            t = kh * KW + kw
            phase = (kh % S) * S + (kw % S)          # which phase plane
            off = (kh // S) * Wq + (kw // S)         # static, contiguous slice
            patch_ref[pl.ds(t * Cin, Cin), :] = x_ref[phase, :, pl.ds(off, Lout)]
    acc = jnp.dot(w_ref[...], patch_ref[...],
                  preferred_element_type=jnp.float32,
                  precision=lax.Precision.HIGHEST)
    acc = acc + b_ref[...].astype(jnp.float32)
    o_ref[...] = acc.astype(o_ref.dtype)


def conv2d_same(x_nchw, weight_oihw, bias, stride, *, mxu_dtype=None):
    """Forward pass of Conv2dSame. x: (N, Cin, H, W) -> (N, Cout, Ho, Wo)."""
    N, Cin, H, W = x_nchw.shape
    Cout, Cin_w, KH, KW = weight_oihw.shape
    assert Cin == Cin_w
    S = int(stride)
    pad_h = conv_same_pad(KH, S)
    pad_w = conv_same_pad(KW, S)

    Hp = H + pad_h[0] + pad_h[1]
    Wp = W + pad_w[0] + pad_w[1]
    Ho = (Hp - KH) // S + 1
    Wo = (Wp - KW) // S + 1

    # Phase-plane geometry (space-to-depth for stride>1; identity for S=1).
    Hq = pl.cdiv(Hp, S)
    Wq = pl.cdiv(Wp, S)
    qh_max = (KH - 1) // S
    qw_max = (KW - 1) // S
    Lq = Hq * Wq                      # flattened length of one phase plane
    Lout = Ho * Wq                    # "wide" output length per batch (>= Ho*Wo)
    Lpad = _round_up(max(Lq, qh_max * Wq + qw_max + Lout), 128)

    # Zero padding (== ConstantPad2d / Conv2d padding) + round H,W up to S.
    x_p = jnp.pad(x_nchw, ((0, 0), (0, 0),
                           (pad_h[0], pad_h[1] + Hq * S - Hp),
                           (pad_w[0], pad_w[1] + Wq * S - Wp)))
    # (N,Cin,Hq,S,Wq,S) -> (N,S,S,Cin,Hq,Wq) -> (N, S*S, Cin, Hq*Wq) [+ lane pad]
    x_ph = x_p.reshape(N, Cin, Hq, S, Wq, S).transpose(0, 3, 5, 1, 2, 4)
    x_ph = x_ph.reshape(N, S * S, Cin, Lq)
    x_ph = jnp.pad(x_ph, ((0, 0), (0, 0), (0, 0), (0, Lpad - Lq)))

    # Flattened weight: w_flat[co, (kh*KW + kw)*Cin + c] = weight[co, c, kh, kw]
    K = KH * KW * Cin
    w_flat = weight_oihw.transpose(0, 2, 3, 1).reshape(Cout, K)
    b_col = bias.reshape(Cout, 1)

    if mxu_dtype is not None:         # e.g. jnp.bfloat16 for v6e/v7x MXU
        x_ph = x_ph.astype(mxu_dtype)
        w_flat = w_flat.astype(mxu_dtype)

    kernel = functools.partial(
        _conv2d_im2col_kernel,
        KH=KH, KW=KW, S=S, Cin=Cin, Wq=Wq, Lout=Lout)

    flops = 2 * N * Ho * Wo * KH * KW * Cin * Cout
    bytes_accessed = int(x_ph.size * x_ph.dtype.itemsize
                         + w_flat.size * w_flat.dtype.itemsize
                         + bias.size * bias.dtype.itemsize
                         + N * Cout * Lout * x_nchw.dtype.itemsize)

    out_wide = pl.pallas_call(
        kernel,
        out_shape=jax.ShapeDtypeStruct((N, Cout, Lout), x_nchw.dtype),
        grid=(N,),
        in_specs=[
            # full (padded, flattened) phase planes for one batch element
            pl.BlockSpec((None, S * S, Cin, Lpad), lambda n: (n, 0, 0, 0)),
            # weight / bias: constant index_map -> stay resident in VMEM
            pl.BlockSpec((Cout, K), lambda n: (0, 0)),
            pl.BlockSpec((Cout, 1), lambda n: (0, 0)),
        ],
        out_specs=pl.BlockSpec((None, Cout, Lout), lambda n: (n, 0, 0)),
        scratch_shapes=[pltpu.VMEM((K, Lout), x_ph.dtype)],
        compiler_params=pltpu.CompilerParams(
            dimension_semantics=("parallel",),
            vmem_limit_bytes=32 * 1024 * 1024),
        cost_estimate=pl.CostEstimate(
            flops=flops, transcendentals=0, bytes_accessed=bytes_accessed),
    )(x_ph, w_flat, b_col)

    # (N,Cout,Ho*Wq) -> (N,Cout,Ho,Wq) is a free reshape; dropping the Wq-Wo
    # wrap columns is the only output-side copy.  No transpose back needed.
    return out_wide.reshape(N, Cout, Ho, Wq)[:, :, :, :Wo]


def _reference(x_nchw, weight_oihw, bias, stride):
    """Plain-JAX reference (same semantics as torch Conv2dSame.forward)."""
    KH, KW = weight_oihw.shape[2], weight_oihw.shape[3]
    pad_h = conv_same_pad(KH, stride)
    pad_w = conv_same_pad(KW, stride)
    out = lax.conv_general_dilated(
        x_nchw, weight_oihw, window_strides=(stride, stride),
        padding=(pad_h, pad_w),
        dimension_numbers=("NCHW", "OIHW", "NCHW"),
        precision=lax.Precision.HIGHEST)
    return out + bias.reshape(1, -1, 1, 1)


if __name__ == "__main__":
    key = jax.random.PRNGKey(0)

    cases = [
        # (in_channels, out_channels, kernel_size, stride)
        (4, 8, 3, 1),   # (k - s) even  -> symmetric int padding branch
        (4, 8, 5, 2),   # (k - s) odd   -> asymmetric ConstantPad2d branch
    ]
    N, H, W = 2, 16, 16

    for (cin, cout, ksize, stride) in cases:
        key, k_w, k_b, k_x = jax.random.split(key, 4)
        fan_in = cin * ksize * ksize
        bound = 1.0 / float(fan_in) ** 0.5
        weight = jax.random.uniform(k_w, (cout, cin, ksize, ksize),
                                    jnp.float32, minval=-bound, maxval=bound)
        bias = jax.random.uniform(k_b, (cout,), jnp.float32,
                                  minval=-bound, maxval=bound)
        x = jax.random.normal(k_x, (N, cin, H, W), jnp.float32)

        out = jax.block_until_ready(conv2d_same(x, weight, bias, stride))
        ref = jax.block_until_ready(_reference(x, weight, bias, stride))

        assert out.shape == ref.shape, (out.shape, ref.shape)
        assert jnp.allclose(out, ref, atol=2e-4, rtol=2e-4), \
            f"mismatch for k={ksize}, s={stride}"

    print("KERNEL_OK")
</pallas_src>

<mosaic_0001>
module attributes {stable_mosaic.version = 11 : i64} {
  func.func @_conv2d_im2col_kernel(%arg0: i32, %arg1: memref<1x1x4x384xf32, #tpu.memory_space<vmem>>, %arg2: memref<8x36xf32, #tpu.memory_space<vmem>>, %arg3: memref<8x1xf32, #tpu.memory_space<vmem>>, %arg4: memref<1x8x288xf32, #tpu.memory_space<vmem>>, %arg5: memref<36x288xf32, #tpu.memory_space<vmem>>) attributes {dimension_semantics = [#tpu.dimension_semantics<parallel>], iteration_bounds = array<i64: 2>, scalar_prefetch = 0 : i64, scratch_operands = 1 : i64, tpu.core_type = #tpu.core_type<tc>, window_params = [{transform_indices = @transform_0, window_bounds = array<i64: 1, 1, 4, 384>}, {pipeline_mode = #tpu.pipeline_mode<synchronous>, transform_indices = @transform_1, window_bounds = array<i64: 8, 36>}, {pipeline_mode = #tpu.pipeline_mode<synchronous>, transform_indices = @transform_2, window_bounds = array<i64: 8, 1>}, {transform_indices = @transform_3, window_bounds = array<i64: 1, 8, 288>}]} {
    %c0 = arith.constant 0 : index
    %c0_0 = arith.constant 0 : index
    %c0_1 = arith.constant 0 : index
    %c0_2 = arith.constant 0 : index
    %0 = vector.load %arg1[%c0, %c0_0, %c0_1, %c0_2] : memref<1x1x4x384xf32, #tpu.memory_space<vmem>>, vector<1x1x4x288xf32>
    %1 = vector.shape_cast %0 : vector<1x1x4x288xf32> to vector<4x288xf32>
    %c0_3 = arith.constant 0 : index
    %c0_4 = arith.constant 0 : index
    %2 = vector.load %arg5[%c0_3, %c0_4] : memref<36x288xf32, #tpu.memory_space<vmem>>, vector<4x288xf32>
    tpu.vector_store %arg5[%c0_3, %c0_4], %1 {strides = array<i32>} : memref<36x288xf32, #tpu.memory_space<vmem>>, vector<4x288xf32>,
    %c0_5 = arith.constant 0 : index
    %c0_6 = arith.constant 0 : index
    %c0_7 = arith.constant 0 : index
    %c1 = arith.constant 1 : index
    %3 = vector.load %arg1[%c0_5, %c0_6, %c0_7, %c1] : memref<1x1x4x384xf32, #tpu.memory_space<vmem>>, vector<1x1x4x288xf32>
    %4 = vector.shape_cast %3 : vector<1x1x4x288xf32> to vector<4x288xf32>
    %c4 = arith.constant 4 : index
    %c0_8 = arith.constant 0 : index
    %5 = vector.load %arg5[%c4, %c0_8] : memref<36x288xf32, #tpu.memory_space<vmem>>, vector<4x288xf32>
    tpu.vector_store %arg5[%c4, %c0_8], %4 {strides = array<i32>} : memref<36x288xf32, #tpu.memory_space<vmem>>, vector<4x288xf32>,
    %c0_9 = arith.constant 0 : index
    %c0_10 = arith.constant 0 : index
    %c0_11 = arith.constant 0 : index
    %c2 = arith.constant 2 : index
    %6 = vector.load %arg1[%c0_9, %c0_10, %c0_11, %c2] : memref<1x1x4x384xf32, #tpu.memory_space<vmem>>, vector<1x1x4x288xf32>
    %7 = vector.shape_cast %6 : vector<1x1x4x288xf32> to vector<4x288xf32>
    %c8 = arith.constant 8 : index
    %c0_12 = arith.constant 0 : index
    %8 = vector.load %arg5[%c8, %c0_12] : memref<36x288xf32, #tpu.memory_space<vmem>>, vector<4x288xf32>
    tpu.vector_store %arg5[%c8, %c0_12], %7 {strides = array<i32>} : memref<36x288xf32, #tpu.memory_space<vmem>>, vector<4x288xf32>,
    %c0_13 = arith.constant 0 : index
    %c0_14 = arith.constant 0 : index
    %c0_15 = arith.constant 0 : index
    %c18 = arith.constant 18 : index
    %9 = vector.load %arg1[%c0_13, %c0_14, %c0_15, %c18] : memref<1x1x4x384xf32, #tpu.memory_space<vmem>>, vector<1x1x4x288xf32>
    %10 = vector.shape_cast %9 : vector<1x1x4x288xf32> to vector<4x288xf32>
    %c12 = arith.constant 12 : index
    %c0_16 = arith.constant 0 : index
    %11 = vector.load %arg5[%c12, %c0_16] : memref<36x288xf32, #tpu.memory_space<vmem>>, vector<4x288xf32>
    tpu.vector_store %arg5[%c12, %c0_16], %10 {strides = array<i32>} : memref<36x288xf32, #tpu.memory_space<vmem>>, vector<4x288xf32>,
    %c0_17 = arith.constant 0 : index
    %c0_18 = arith.constant 0 : index
    %c0_19 = arith.constant 0 : index
    %c19 = arith.constant 19 : index
    %12 = vector.load %arg1[%c0_17, %c0_18, %c0_19, %c19] : memref<1x1x4x384xf32, #tpu.memory_space<vmem>>, vector<1x1x4x288xf32>
    %13 = vector.shape_cast %12 : vector<1x1x4x288xf32> to vector<4x288xf32>
    %c16 = arith.constant 16 : index
    %c0_20 = arith.constant 0 : index
    %14 = vector.load %arg5[%c16, %c0_20] : memref<36x288xf32, #tpu.memory_space<vmem>>, vector<4x288xf32>
    tpu.vector_store %arg5[%c16, %c0_20], %13 {strides = array<i32>} : memref<36x288xf32, #tpu.memory_space<vmem>>, vector<4x288xf32>,
    %c0_21 = arith.constant 0 : index
    %c0_22 = arith.constant 0 : index
    %c0_23 = arith.constant 0 : index
    %c20 = arith.constant 20 : index
    %15 = vector.load %arg1[%c0_21, %c0_22, %c0_23, %c20] : memref<1x1x4x384xf32, #tpu.memory_space<vmem>>, vector<1x1x4x288xf32>
    %16 = vector.shape_cast %15 : vector<1x1x4x288xf32> to vector<4x288xf32>
    %c20_24 = arith.constant 20 : index
    %c0_25 = arith.constant 0 : index
    %17 = vector.load %arg5[%c20_24, %c0_25] : memref<36x288xf32, #tpu.memory_space<vmem>>, vector<4x288xf32>
    tpu.vector_store %arg5[%c20_24, %c0_25], %16 {strides = array<i32>} : memref<36x288xf32, #tpu.memory_space<vmem>>, vector<4x288xf32>,
    %c0_26 = arith.constant 0 : index
    %c0_27 = arith.constant 0 : index
    %c0_28 = arith.constant 0 : index
    %c36 = arith.constant 36 : index
    %18 = vector.load %arg1[%c0_26, %c0_27, %c0_28, %c36] : memref<1x1x4x384xf32, #tpu.memory_space<vmem>>, vector<1x1x4x288xf32>
    %19 = vector.shape_cast %18 : vector<1x1x4x288xf32> to vector<4x288xf32>
    %c24 = arith.constant 24 : index
    %c0_29 = arith.constant 0 : index
    %20 = vector.load %arg5[%c24, %c0_29] : memref<36x288xf32, #tpu.memory_space<vmem>>, vector<4x288xf32>
    tpu.vector_store %arg5[%c24, %c0_29], %19 {strides = array<i32>} : memref<36x288xf32, #tpu.memory_space<vmem>>, vector<4x288xf32>,
    %c0_30 = arith.constant 0 : index
    %c0_31 = arith.constant 0 : index
    %c0_32 = arith.constant 0 : index
    %c37 = arith.constant 37 : index
    %21 = vector.load %arg1[%c0_30, %c0_31, %c0_32, %c37] : memref<1x1x4x384xf32, #tpu.memory_space<vmem>>, vector<1x1x4x288xf32>
    %22 = vector.shape_cast %21 : vector<1x1x4x288xf32> to vector<4x288xf32>
    %c28 = arith.constant 28 : index
    %c0_33 = arith.constant 0 : index
    %23 = vector.load %arg5[%c28, %c0_33] : memref<36x288xf32, #tpu.memory_space<vmem>>, vector<4x288xf32>
    tpu.vector_store %arg5[%c28, %c0_33], %22 {strides = array<i32>} : memref<36x288xf32, #tpu.memory_space<vmem>>, vector<4x288xf32>,
    %c0_34 = arith.constant 0 : index
    %c0_35 = arith.constant 0 : index
    %c0_36 = arith.constant 0 : index
    %c38 = arith.constant 38 : index
    %24 = vector.load %arg1[%c0_34, %c0_35, %c0_36, %c38] : memref<1x1x4x384xf32, #tpu.memory_space<vmem>>, vector<1x1x4x288xf32>
    %25 = vector.shape_cast %24 : vector<1x1x4x288xf32> to vector<4x288xf32>
    %c32 = arith.constant 32 : index
    %c0_37 = arith.constant 0 : index
    %26 = vector.load %arg5[%c32, %c0_37] : memref<36x288xf32, #tpu.memory_space<vmem>>, vector<4x288xf32>
    tpu.vector_store %arg5[%c32, %c0_37], %25 {strides = array<i32>} : memref<36x288xf32, #tpu.memory_space<vmem>>, vector<4x288xf32>,
    %c0_38 = arith.constant 0 : index
    %c0_39 = arith.constant 0 : index
    %27 = vector.load %arg2[%c0_38, %c0_39] : memref<8x36xf32, #tpu.memory_space<vmem>>, vector<8x36xf32>
    %c0_40 = arith.constant 0 : index
    %c0_41 = arith.constant 0 : index
    %28 = vector.load %arg5[%c0_40, %c0_41] : memref<36x288xf32, #tpu.memory_space<vmem>>, vector<36x288xf32>
    %cst = arith.constant dense<0.000000e+00> : vector<8x288xf32>
    %29 = tpu.matmul %27, %28, %cst {dimension_numbers = #tpu.dot_dimension_numbers<[1], [0], [0], [1], [0, 0, 1, 1], [], []>, precision = #tpu.contract_precision<fp32>} : vector<8x36xf32>, vector<36x288xf32>, vector<8x288xf32> -> vector<8x288xf32>
    %c0_42 = arith.constant 0 : index
    %c0_43 = arith.constant 0 : index
    %30 = vector.load %arg3[%c0_42, %c0_43] : memref<8x1xf32, #tpu.memory_space<vmem>>, vector<8x1xf32>
    %31 = vector.broadcast %30 : vector<8x1xf32> to vector<8x288xf32>
    %32 = arith.addf %29, %31 : vector<8x288xf32>
    %c0_44 = arith.constant 0 : index
    %c0_45 = arith.constant 0 : index
    %c0_46 = arith.constant 0 : index
    %33 = vector.load %arg4[%c0_44, %c0_45, %c0_46] : memref<1x8x288xf32, #tpu.memory_space<vmem>>, vector<1x8x288xf32>
    %34 = vector.shape_cast %33 : vector<1x8x288xf32> to vector<8x288xf32>
    %35 = vector.shape_cast %32 : vector<8x288xf32> to vector<1x8x288xf32>
    tpu.vector_store %arg4[%c0_44, %c0_45, %c0_46], %35 {strides = array<i32>} : memref<1x8x288xf32, #tpu.memory_space<vmem>>, vector<1x8x288xf32>,
    return
  }
  func.func @transform_0(%arg0: i32) -> (i32, i32, i32, i32) {
    %c0_i32 = arith.constant 0 : i32
    %c0_i32_0 = arith.constant 0 : i32
    %c0_i32_1 = arith.constant 0 : i32
    %c0_i32_2 = arith.constant 0 : i32
    return %arg0, %c0_i32, %c0_i32_0, %c0_i32_1 : i32, i32, i32, i32
  }
  func.func @transform_1(%arg0: i32) -> (i32, i32) {
    %c0_i32 = arith.constant 0 : i32
    %c0_i32_0 = arith.constant 0 : i32
    %c0_i32_1 = arith.constant 0 : i32
    return %c0_i32, %c0_i32_0 : i32, i32
  }
  func.func @transform_2(%arg0: i32) -> (i32, i32) {
    %c0_i32 = arith.constant 0 : i32
    %c0_i32_0 = arith.constant 0 : i32
    %c0_i32_1 = arith.constant 0 : i32
    return %c0_i32, %c0_i32_0 : i32, i32
  }
  func.func @transform_3(%arg0: i32) -> (i32, i32, i32) {
    %c0_i32 = arith.constant 0 : i32
    %c0_i32_0 = arith.constant 0 : i32
    %c0_i32_1 = arith.constant 0 : i32
    return %arg0, %c0_i32, %c0_i32_0 : i32, i32, i32
  }
}

</mosaic_0001>

<llo_original>
// kernel: tpu_custom_call.1
$region0: #{tpu_custom_call.1}
  #allocation0 [shape = 'u32[]', space=smem, size = 0x4, offset = 0x4, fixed_abs, tag = 'smem constant byte address 0x4 - core index']
  #allocation1 [shape = 'u32[144,128]{1,0:T(1,128)}', space=vmem, size = 0x12000, scoped, tag = 'internal scratch']
  #allocation2 [shape = 'f32[36,288]{1,0:T(8,128)}', space=vmem, size = 0xf000, scoped, tag = 'scratch operand']
  %s0 = inlined_call_operand.hbm [shape: f32[2,1,4,384], index: 0, kind: input, shape index: {}]
  %s1 = inlined_call_operand.vmem [shape: f32[8,36], index: 1, kind: input, shape index: {}]
  %s2 = inlined_call_operand.vmem [shape: f32[8,1], index: 2, kind: input, shape index: {}]
  %s3 = inlined_call_operand.hbm [shape: f32[2,8,288], index: 3, kind: output, shape index: {}]
  %s4 = sld [smem:[#allocation0]]
  $region49: #{tpu_custom_call.1} parent=0
    _
  %s6 = ssub.s32 1, %s4
  %s7 = scalar_select 0, %s6, %s4
  $region1: #{tpu_custom_call.1} parent=0
    #allocation3 [shape = 'u8[12288]{0}', space=vmem, size = 0x3000, scoped, tag = 'input window, operand 0']
    #allocation4 [shape = 's32[2]{0}', space=sflag, size = 0x8, scoped, tag = 'scoped memory for tpu_custom_call.1']
    #allocation5 [shape = 's32[2]{0}', space=sflag, size = 0x8, scoped, tag = 'scoped memory for tpu_custom_call.1']
    #allocation6 [shape = 'u8[24576]{0}', space=vmem, size = 0x6000, scoped, tag = 'output window, operand 0']
    %8 = vsyncpa [#allocation4], 0
    %s9 = scalar_lea.sflag [#allocation4], 1
    %10 = vsyncpa %s9, 0
    %11 = vsyncpa [#allocation5], 0
    %s12 = scalar_lea.sflag [#allocation5], 1
    %13 = vsyncpa %s12, 0
    loop: start=0, step=1, limit=4
    $region2: #{tpu_custom_call.1} parent=1 // loop_pre_header
      _
    $region3: #{tpu_custom_call.1} parent=1 // loop_header
      %s15 = sphi 0, %s19
      %p16 = scmp.ge.s32.totalorder %s15, 4
      %s25 = sphi 0, %s27
      %s28 = sphi 0, %s25
      %s29 = sphi 0, %s28
      %s45 = sphi 0, %s29
      %s49 = sphi 0, %s49
      %s51 = sphi 0, %s49
      %s52 = sphi 0, %s51
      %s66 = sphi 0, %s52
      %s70 = sphi 0, %s70
      %s72 = sphi 0, %s70
      %s73 = sphi 0, %s72
      %s87 = sphi 0, %s73
      %s93 = sphi 0, %s95
      %s96 = sphi 0, %s93
      %s97 = sphi 0, %s96
      %s113 = sphi 0, %s97
    $region4: #{tpu_custom_call.1} parent=1 // loop_header_branch
      %18 = sbr.rel (%p16) target = $region8
    $region5: #{tpu_custom_call.1} parent=1 // loop_body
      %s20 = ssub.s32 %s15, 1
      %s21 = ssub.s32 %s15, 2
      %s22 = sadd.s32 %s15, 1
      %s23 = ssub.s32 %s15, %s22
      %p24 = scmp.eq.s32.totalorder %s23, 0
      %s26 = sadd.s32 %s25, 1
      %s27 = scalar_select %p24, %s25, %s26
      %p30 = pneg %p24
      %p31 = scmp.eq.s32.totalorder %s15, 1
      %p32 = por %p30, %p31
      %p33 = scmp.ne.s32.totalorder %s25, %s28
      %p34 = scmp.eq.s32.totalorder %s15, 0
      %p35 = por %p33, %p34
      %p36 = scmp.ne.s32.totalorder %s25, %s28
      %p37 = scmp.eq.s32.totalorder %s20, 1
      %p38 = por %p36, %p37
      %p39 = scmp.ne.s32.totalorder %s28, %s29
      %p40 = scmp.eq.s32.totalorder %s20, 0
      %p41 = por %p39, %p40
      %p42 = scmp.ne.s32.totalorder %s28, %s29
      %p43 = scmp.eq.s32.totalorder %s21, 1
      %p44 = por %p42, %p43
      %p46 = scmp.ne.s32.totalorder %s29, %s45
      %p47 = scmp.eq.s32.totalorder %s21, 0
      %p48 = por %p46, %p47
      %s50 = sadd.s32 %s49, 1
      %p53 = scmp.eq.s32.totalorder %s15, 1
      %p54 = scmp.ne.s32.totalorder %s49, %s51
      %p55 = scmp.eq.s32.totalorder %s15, 0
      %p56 = por %p54, %p55
      %p57 = scmp.ne.s32.totalorder %s49, %s51
      %p58 = scmp.eq.s32.totalorder %s20, 1
      %p59 = por %p57, %p58
      %p60 = scmp.ne.s32.totalorder %s51, %s52
      %p61 = scmp.eq.s32.totalorder %s20, 0
      %p62 = por %p60, %p61
      %p63 = scmp.ne.s32.totalorder %s51, %s52
      %p64 = scmp.eq.s32.totalorder %s21, 1
      %p65 = por %p63, %p64
      %p67 = scmp.ne.s32.totalorder %s52, %s66
      %p68 = scmp.eq.s32.totalorder %s21, 0
      %p69 = por %p67, %p68
      %s71 = sadd.s32 %s70, 1
      %p74 = scmp.eq.s32.totalorder %s15, 1
      %p75 = scmp.ne.s32.totalorder %s70, %s72
      %p76 = scmp.eq.s32.totalorder %s15, 0
      %p77 = por %p75, %p76
      %p78 = scmp.ne.s32.totalorder %s70, %s72
      %p79 = scmp.eq.s32.totalorder %s20, 1
      %p80 = por %p78, %p79
      %p81 = scmp.ne.s32.totalorder %s72, %s73
      %p82 = scmp.eq.s32.totalorder %s20, 0
      %p83 = por %p81, %p82
      %p84 = scmp.ne.s32.totalorder %s72, %s73
      %p85 = scmp.eq.s32.totalorder %s21, 1
      %p86 = por %p84, %p85
      %p88 = scmp.ne.s32.totalorder %s73, %s87
      %p89 = scmp.eq.s32.totalorder %s21, 0
      %p90 = por %p88, %p89
      %s91 = ssub.s32 %s15, %s22
      %p92 = scmp.eq.s32.totalorder %s91, 0
      %s94 = sadd.s32 %s93, 1
      %s95 = scalar_select %p92, %s93, %s94
      %p98 = pneg %p92
      %p99 = scmp.eq.s32.totalorder %s15, 1
      %p100 = por %p98, %p99
      %p101 = scmp.ne.s32.totalorder %s93, %s96
      %p102 = scmp.eq.s32.totalorder %s15, 0
      %p103 = por %p101, %p102
      %p104 = scmp.ne.s32.totalorder %s93, %s96
      %p105 = scmp.eq.s32.totalorder %s20, 1
      %p106 = por %p104, %p105
      %p107 = scmp.ne.s32.totalorder %s96, %s97
      %p108 = scmp.eq.s32.totalorder %s20, 0
      %p109 = por %p107, %p108
      %p110 = scmp.ne.s32.totalorder %s96, %s97
      %p111 = scmp.eq.s32.totalorder %s21, 1
      %p112 = por %p110, %p111
      %p114 = scmp.ne.s32.totalorder %s97, %s113
      %p115 = scmp.eq.s32.totalorder %s21, 0
      %p116 = por %p114, %p115
      %p117 = scmp.le.s32.totalorder 1, %s15
      %p118 = scmp.lt.s32.totalorder %s15, 3
      %p119 = pnand %p117, %p118
      %p120 = pneg %p119
      // Predicated region
      $region9: #{tpu_custom_call.1} parent=5 // pred_check
        _
      $region10: #{tpu_custom_call.1} parent=5 // pred_check_branch
        %122 = sbr.rel (%p119) target = $region12
      $region11: #{tpu_custom_call.1} parent=5 // pred_region
        %s123 = ssub.s32 %s15, 1
        // Predicated region
        $region13: #{tpu_custom_call.1} parent=11 // pred_check
          %p124 = pneg %p62
        $region14: #{tpu_custom_call.1} parent=11 // pred_check_branch
          %126 = sbr.rel (%p124) target = $region16
        $region15: #{tpu_custom_call.1} parent=11 // pred_region
          _
        $region16: #{tpu_custom_call.1} parent=11 // pred_fallthru
          _
        // Predicated region
        $region17: #{tpu_custom_call.1} parent=11 // pred_check
          %p127 = pneg %p83
        $region18: #{tpu_custom_call.1} parent=11 // pred_check_branch
          %129 = sbr.rel (%p127) target = $region20
        $region19: #{tpu_custom_call.1} parent=11 // pred_region
          _
        $region20: #{tpu_custom_call.1} parent=11 // pred_fallthru
          _
      $region12: #{tpu_custom_call.1} parent=5 // pred_fallthru
        _
      %p130 = scmp.lt.s32.totalorder %s15, 2
      // Predicated region
      $region21: #{tpu_custom_call.1} parent=5 // pred_check
        %p131 = pneg %p130
      $region22: #{tpu_custom_call.1} parent=5 // pred_check_branch
        %133 = sbr.rel (%p131) target = $region24
      $region23: #{tpu_custom_call.1} parent=5 // pred_region
        // Predicated region
        $region25: #{tpu_custom_call.1} parent=23 // pred_check
          %p134 = pneg %p35
        $region26: #{tpu_custom_call.1} parent=23 // pred_check_branch
          %136 = sbr.rel (%p134) target = $region28
        $region27: #{tpu_custom_call.1} parent=23 // pred_region
          %s137 = sand.u32 %s25, 1
          %s138 = scalar_lea.sflag [#allocation4], %s137
          %s139 = sand.u32 %s25, 1
          %s140 = smul.addr %s139, 12
          %s141 = scalar_lea.vmem [#allocation3], %s140
          %s143 = ssub.s32 192, 192
          %144 = vsyncadd %s138, %s143
          %s145 = smul.addr %s15, 3
          %s146 = smul.addr %s145, 64
          %s147 = scalar_lea.hbm %s0, %s146
          %s149 = sshll.u32 %s141, 4
          %s150 = int_to_ptr.vmem [resolvable:$true] %s149
          %152 = dma.hbm_to_vmem [thread:$0]  %s147, 192, %s150, %s138
        $region28: #{tpu_custom_call.1} parent=23 // pred_fallthru
          _
      $region24: #{tpu_custom_call.1} parent=5 // pred_fallthru
        _
      %p153 = scmp.le.s32.totalorder 1, %s15
      %p154 = scmp.lt.s32.totalorder %s15, 3
      %p155 = pnand %p153, %p154
      %p156 = pneg %p155
      // Predicated region
      $region29: #{tpu_custom_call.1} parent=5 // pred_check
        _
      $region30: #{tpu_custom_call.1} parent=5 // pred_check_branch
        %158 = sbr.rel (%p155) target = $region32
      $region31: #{tpu_custom_call.1} parent=5 // pred_region
        %s159 = ssub.s32 %s15, 1
        %s160 = sand.u32 %s28, 1
        %s161 = scalar_lea.sflag [#allocation4], %s160
        %s162 = sand.u32 %s28, 1
        %s163 = smul.addr %s162, 12
        %s164 = scalar_lea.vmem [#allocation3], %s163
        // Predicated region
        $region33: #{tpu_custom_call.1} parent=31 // pred_check
          %p165 = pneg %p41
        $region34: #{tpu_custom_call.1} parent=31 // pred_check_branch
          %167 = sbr.rel (%p165) target = $region36
        $region35: #{tpu_custom_call.1} parent=31 // pred_region
          %168 = dma.done %s161, 192
        $region36: #{tpu_custom_call.1} parent=31 // pred_fallthru
          _
        %s169 = sand.u32 %s28, 1
        %s170 = scalar_lea.sflag [#allocation4], %s169
        %s171 = sand.u32 %s28, 1
        %s172 = smul.addr %s171, 12
        %s173 = scalar_lea.vmem [#allocation3], %s172
        %p174 = pneg %p41
        %p175 = pneg %p38
        %p176 = pneg %p62
        %p177 = pneg %p59
        %p178 = pneg %p83
        %p179 = pneg %p80
        %p180 = pneg %p109
        %p181 = pneg %p106
        %s182 = sand.u32 %s96, 1
        %s183 = scalar_lea.sflag [#allocation5], %s182
        %s184 = sand.u32 %s96, 1
        %s185 = smul.addr %s184, 24
        %s186 = scalar_lea.vmem [#allocation6], %s185
        %v187 = vld [vmem:[%s164] sm:$0xff]
        %v188 = vld [vmem:[%s164 + $0x8] sm:$0xf]
        %v190 = vcombine.high %v187, %v187
        %192 = vst [vmem:[#allocation2] sm:$0xf] %v187
        %193 = vst [vmem:[#allocation2 + $0x8] sm:$0xf] %v190
        %vm194 = vcmask 257024
        %195 = vst.msk [vmem:[#allocation2 + $0x10] sm:$0xf] %vm194, %v188
        %v196 = vld [vmem:[%s164] sm:$0xff]
        %v197 = vld [vmem:[%s164 + $0x8] sm:$0xf]
        %v200 = vcombine.low %v196, %v196
        %v201 = vcombine.low %v197, %v197
        %202 = vrot.lane.b32.xlu0 %v200, 127
        %v203 = vpop.permute.xlu0 %202
        %204 = vrot.lane.b32.xlu0 %v196, 127
        %v205 = vpop.permute.xlu0 %204
        %206 = vrot.lane.b32.xlu0 %v201, 127
        %v207 = vpop.permute.xlu0 %206
        %vm208 = vcmask 1039360
        %v209 = vsel %vm208, %v203, %v205
        %v210 = vsel %vm208, %v205, %v207
        %214 = vst [vmem:[#allocation2] sm:$0xf0] %v209
        %215 = vst [vmem:[#allocation2 + $0x8] sm:$0xf0] %v210
        %vm216 = vcmask 261124
        %217 = vst.msk [vmem:[#allocation2 + $0x10] sm:$0xf0] %vm216, %v207
        %v218 = vld [vmem:[%s164] sm:$0xff]
        %v219 = vld [vmem:[%s164 + $0x8] sm:$0xf]
        %v222 = vcombine.high %v218, %v218
        %223 = vrot.lane.b32.xlu0 %v218, 126
        %v224 = vpop.permute.xlu0 %223
        %225 = vrot.lane.b32.xlu0 %v222, 126
        %v226 = vpop.permute.xlu0 %225
        %227 = vrot.lane.b32.xlu0 %v219, 126
        %v228 = vpop.permute.xlu0 %227
        %vm229 = vcmask 1031168
        %v230 = vsel %vm229, %v224, %v226
        %v231 = vsel %vm229, %v226, %v228
        %235 = vst [vmem:[#allocation2 + $0x18] sm:$0xf] %v230
        %236 = vst [vmem:[#allocation2 + $0x20] sm:$0xf] %v231
        %237 = vst.msk [vmem:[#allocation2 + $0x28] sm:$0xf] %vm194, %v228
        %v238 = vld [vmem:[%s164] sm:$0xff]
        %v239 = vld [vmem:[%s164 + $0x8] sm:$0xf]
        %v242 = vcombine.low %v238, %v238
        %v243 = vcombine.low %v239, %v239
        %244 = vrot.lane.b32.xlu0 %v242, 110
        %v245 = vpop.permute.xlu0 %244
        %246 = vrot.lane.b32.xlu0 %v238, 110
        %v247 = vpop.permute.xlu0 %246
        %248 = vrot.lane.b32.xlu0 %v243, 110
        %v249 = vpop.permute.xlu0 %248
        %vm250 = vcmask 900096
        %v251 = vsel %vm250, %v245, %v247
        %v252 = vsel %vm250, %v247, %v249
        %256 = vst [vmem:[#allocation2 + $0x18] sm:$0xf0] %v251
        %257 = vst [vmem:[#allocation2 + $0x20] sm:$0xf0] %v252
        %258 = vst.msk [vmem:[#allocation2 + $0x28] sm:$0xf0] %vm216, %v249
        %v259 = vld [vmem:[%s164] sm:$0xff]
        %v260 = vld [vmem:[%s164 + $0x8] sm:$0xf]
        %v263 = vcombine.high %v259, %v259
        %264 = vrot.lane.b32.xlu0 %v259, 109
        %v265 = vpop.permute.xlu0 %264
        %266 = vrot.lane.b32.xlu0 %v263, 109
        %v267 = vpop.permute.xlu0 %266
        %268 = vrot.lane.b32.xlu0 %v260, 109
        %v269 = vpop.permute.xlu0 %268
        %vm270 = vcmask 891904
        %v271 = vsel %vm270, %v265, %v267
        %v272 = vsel %vm270, %v267, %v269
        %276 = vst [vmem:[#allocation2 + $0x30] sm:$0xf] %v271
        %277 = vst [vmem:[#allocation2 + $0x38] sm:$0xf] %v272
        %278 = vst.msk [vmem:[#allocation2 + $0x40] sm:$0xf] %vm194, %v269
        %v279 = vld [vmem:[%s164] sm:$0xff]
        %v280 = vld [vmem:[%s164 + $0x8] sm:$0xf]
        %v283 = vcombine.low %v279, %v279
        %v284 = vcombine.low %v280, %v280
        %285 = vrot.lane.b32.xlu0 %v283, 108
        %v286 = vpop.permute.xlu0 %285
        %287 = vrot.lane.b32.xlu0 %v279, 108
        %v288 = vpop.permute.xlu0 %287
        %289 = vrot.lane.b32.xlu0 %v284, 108
        %v290 = vpop.permute.xlu0 %289
        %vm291 = vcmask 883712
        %v292 = vsel %vm291, %v286, %v288
        %v293 = vsel %vm291, %v288, %v290
        %297 = vst [vmem:[#allocation2 + $0x30] sm:$0xf0] %v292
        %298 = vst [vmem:[#allocation2 + $0x38] sm:$0xf0] %v293
        %299 = vst.msk [vmem:[#allocation2 + $0x40] sm:$0xf0] %vm216, %v290
        %v300 = vld [vmem:[%s164] sm:$0xff]
        %v301 = vld [vmem:[%s164 + $0x8] sm:$0xf]
        %v304 = vcombine.high %v300, %v300
        %305 = vrot.lane.b32.xlu0 %v300, 92
        %v306 = vpop.permute.xlu0 %305
        %307 = vrot.lane.b32.xlu0 %v304, 92
        %v308 = vpop.permute.xlu0 %307
        %309 = vrot.lane.b32.xlu0 %v301, 92
        %v310 = vpop.permute.xlu0 %309
        %vm311 = vcmask 752640
        %v312 = vsel %vm311, %v306, %v308
        %v313 = vsel %vm311, %v308, %v310
        %317 = vst [vmem:[#allocation2 + $0x48] sm:$0xf] %v312
        %318 = vst [vmem:[#allocation2 + $0x50] sm:$0xf] %v313
        %319 = vst.msk [vmem:[#allocation2 + $0x58] sm:$0xf] %vm194, %v310
        %v320 = vld [vmem:[%s164] sm:$0xff]
        %v321 = vld [vmem:[%s164 + $0x8] sm:$0xf]
        %v324 = vcombine.low %v320, %v320
        %v325 = vcombine.low %v321, %v321
        %326 = vrot.lane.b32.xlu0 %v324, 91
        %v327 = vpop.permute.xlu0 %326
        %328 = vrot.lane.b32.xlu0 %v320, 91
        %v329 = vpop.permute.xlu0 %328
        %330 = vrot.lane.b32.xlu0 %v325, 91
        %v331 = vpop.permute.xlu0 %330
        %vm332 = vcmask 744448
        %v333 = vsel %vm332, %v327, %v329
        %v334 = vsel %vm332, %v329, %v331
        %338 = vst [vmem:[#allocation2 + $0x48] sm:$0xf0] %v333
        %339 = vst [vmem:[#allocation2 + $0x50] sm:$0xf0] %v334
        %340 = vst.msk [vmem:[#allocation2 + $0x58] sm:$0xf0] %vm216, %v331
        %v341 = vld [vmem:[%s164] sm:$0xff]
        %v342 = vld [vmem:[%s164 + $0x8] sm:$0xf]
        %v345 = vcombine.high %v341, %v341
        %346 = vrot.lane.b32.xlu0 %v341, 90
        %v347 = vpop.permute.xlu0 %346
        %348 = vrot.lane.b32.xlu0 %v345, 90
        %v349 = vpop.permute.xlu0 %348
        %350 = vrot.lane.b32.xlu0 %v342, 90
        %v351 = vpop.permute.xlu0 %350
        %vm352 = vcmask 736256
        %v353 = vsel %vm352, %v347, %v349
        %v354 = vsel %vm352, %v349, %v351
        %358 = vst [vmem:[#allocation2 + $0x60] sm:$0xf] %v353
        %359 = vst [vmem:[#allocation2 + $0x68] sm:$0xf] %v354
        %360 = vst.msk [vmem:[#allocation2 + $0x70] sm:$0xf] %vm194, %v351
        %v361 = vld [vmem:[%s1] sm:$0xff]
        %v362 = vld [vmem:[#allocation2] sm:$0xff]
        %v363 = vld [vmem:[#allocation2 + $0x8] sm:$0xff]
        %v364 = vld [vmem:[#allocation2 + $0x10] sm:$0xff]
        %v365 = vld [vmem:[#allocation2 + $0x18] sm:$0xff]
        %v366 = vld [vmem:[#allocation2 + $0x20] sm:$0xff]
        %v367 = vld [vmem:[#allocation2 + $0x28] sm:$0xff]
        %v368 = vld [vmem:[#allocation2 + $0x30] sm:$0xff]
        %v369 = vld [vmem:[#allocation2 + $0x38] sm:$0xff]
        %v370 = vld [vmem:[#allocation2 + $0x40] sm:$0xff]
        %v371 = vld [vmem:[#allocation2 + $0x48] sm:$0xff]
        %v372 = vld [vmem:[#allocation2 + $0x50] sm:$0xff]
        %v373 = vld [vmem:[#allocation2 + $0x58] sm:$0xff]
        %v374 = vld [vmem:[#allocation2 + $0x60] sm:$0xf]
        %v375 = vld [vmem:[#allocation2 + $0x68] sm:$0xf]
        %v376 = vld [vmem:[#allocation2 + $0x70] sm:$0xf]
        %v377 = vld [vmem:[%s2] sm:$0xff]
        %379 = vset.pattern.permute.xlu0 0
        %380 = vperm.xlu0 %379, %v377
        %v381 = vpop.permute.xlu0 %380
        %vm383 = vcmask 293888
        %v385 = vsel %vm383, %v361, 0
        %vm387 = vcmask 1043456
        %v389 = vsel %vm387, %v374, 0
        %v392 = vsel %vm387, %v375, 0
        %v395 = vsel %vm387, %v376, 0
        %397 = vmatprep.subr.mxu0 0.0
        %398 = vmatpush1.msra.mxu0 0.0
        %399 = vmatprep.subr.mxu0 0.0
        %400 = vmatpush1.msra.mxu0 0.0
        %401 = vmatprep.subr.mxu0 0.0
        %402 = vmatpush1.msra.mxu0 0.0
        %403 = vmatprep.subr.mxu0 0.0
        %404 = vmatpush1.msra.mxu0 0.0
        %405 = vmatprep.subr.mxu0 0.0
        %406 = vmatpush1.msra.mxu0 0.0
        %407 = vmatprep.subr.mxu0 0.0
        %408 = vmatpush1.msra.mxu0 0.0
        %409 = vmatprep.subr.mxu0 0.0
        %410 = vmatpush1.msra.mxu0 0.0
        %411 = vmatprep.subr.mxu0 0.0
        %412 = vmatpush1.msra.mxu0 0.0
        %413 = vmatprep.subr.mxu0 0.0
        %414 = vmatpush1.msra.mxu0 0.0
        %415 = vmatprep.subr.mxu0 0.0
        %416 = vmatpush1.msra.mxu0 0.0
        %417 = vmatprep.subr.mxu0 0.0
        %418 = vmatpush1.msra.mxu0 0.0
        %v419 = vand.u32 %v392, 4294901760
        %420 = vmatprep.subr.mxu0 %v419
        %v421 = vand.u32 %v389, 4294901760
        %422 = vmatpush1.msra.mxu0 %v421
        %v423 = vand.u32 %v372, 4294901760
        %424 = vmatprep.subr.mxu0 %v423
        %v425 = vand.u32 %v371, 4294901760
        %426 = vmatpush1.msra.mxu0 %v425
        %v427 = vand.u32 %v369, 4294901760
        %428 = vmatprep.subr.mxu0 %v427
        %v429 = vand.u32 %v368, 4294901760
        %430 = vmatpush1.msra.mxu0 %v429
        %v431 = vand.u32 %v366, 4294901760
        %432 = vmatprep.subr.mxu0 %v431
        %v433 = vand.u32 %v365, 4294901760
        %434 = vmatpush1.msra.mxu0 %v433
        %v435 = vand.u32 %v363, 4294901760
        %436 = vmatprep.subr.mxu0 %v435
        %v437 = vand.u32 %v362, 4294901760
        %438 = vmatpush1.msra.mxu0 %v437
        %439 = vmatprep.subr.mxu0 0.0
        %440 = vmatpush2.msra.mxu0 0.0
        %441 = vmatprep.subr.mxu0 0.0
        %442 = vmatpush2.msra.mxu0 0.0
        %443 = vmatprep.subr.mxu0 0.0
        %444 = vmatpush2.msra.mxu0 0.0
        %445 = vmatprep.subr.mxu0 0.0
        %446 = vmatpush2.msra.mxu0 0.0
        %447 = vmatprep.subr.mxu0 0.0
        %448 = vmatpush2.msra.mxu0 0.0
        %449 = vmatprep.subr.mxu0 0.0
        %450 = vmatpush2.msra.mxu0 0.0
        %451 = vmatprep.subr.mxu0 0.0
        %452 = vmatpush2.msra.mxu0 0.0
        %453 = vmatprep.subr.mxu0 0.0
        %454 = vmatpush2.msra.mxu0 0.0
        %455 = vmatprep.subr.mxu0 0.0
        %456 = vmatpush2.msra.mxu0 0.0
        %457 = vmatprep.subr.mxu0 0.0
        %458 = vmatpush2.msra.mxu0 0.0
        %459 = vmatprep.subr.mxu0 0.0
        %460 = vmatpush2.msra.mxu0 0.0
        %461 = vmatprep.subr.mxu0 0.0
        %462 = vmatpush2.msra.mxu0 0.0
        %463 = vmatprep.subr.mxu0 0.0
        %464 = vmatpush2.msra.mxu0 0.0
        %465 = vmatprep.subr.mxu0 0.0
        %466 = vmatpush2.msra.mxu0 0.0
        %467 = vmatprep.subr.mxu0 0.0
        %468 = vmatpush2.msra.mxu0 0.0
        %469 = vmatprep.subr.mxu0 0.0
        %470 = vmatpush2.msra.mxu0 0.0
        %471 = vmatprep.mubr.f32.mxu0 0.0
        %v472 = vand.u32 %v385, 4294901760
        %v473 = vsub.f32 %v385, %v472
        %v474 = vand.u32 %v473, 4294901760
        %v475 = vsub.f32 %v473, %v474
        %v476 = vand.u32 %v475, 4294901760
        %477 = vmatmul.mubr.f32.gmra.mxu0 %v476
        %v478 = vpop.f32.mrf.mxu0
        %v479 = vadd.f32 %v381, %v478
        %v480 = vpop.f32.mrf.mxu0
        %v481 = vadd.f32 %v381, %v480
        %482 = vdwg.mxu0
        %483 = vmatprep.subr.mxu0 0.0
        %484 = vmatpush1.msra.mxu0 0.0
        %485 = vmatprep.subr.mxu0 0.0
        %486 = vmatpush1.msra.mxu0 0.0
        %487 = vmatprep.subr.mxu0 0.0
        %488 = vmatpush1.msra.mxu0 0.0
        %489 = vmatprep.subr.mxu0 0.0
        %490 = vmatpush1.msra.mxu0 0.0
        %491 = vmatprep.subr.mxu0 0.0
        %492 = vmatpush1.msra.mxu0 0.0
        %493 = vmatprep.subr.mxu0 0.0
        %494 = vmatpush1.msra.mxu0 0.0
        %495 = vmatprep.subr.mxu0 0.0
        %496 = vmatpush1.msra.mxu0 0.0
        %497 = vmatprep.subr.mxu0 0.0
        %498 = vmatpush1.msra.mxu0 0.0
        %499 = vmatprep.subr.mxu0 0.0
        %500 = vmatpush1.msra.mxu0 0.0
        %501 = vmatprep.subr.mxu0 0.0
        %502 = vmatpush1.msra.mxu0 0.0
        %503 = vmatprep.subr.mxu0 0.0
        %504 = vmatpush1.msra.mxu0 0.0
        %v505 = vand.u32 %v392, 4294901760
        %v506 = vsub.f32 %v392, %v505
        %v507 = vand.u32 %v506, 4294901760
        %v508 = vsub.f32 %v506, %v507
        %v509 = vand.u32 %v508, 4294901760
        %510 = vmatprep.subr.mxu0 %v509
        %v511 = vand.u32 %v389, 4294901760
        %v512 = vsub.f32 %v389, %v511
        %v513 = vand.u32 %v512, 4294901760
        %v514 = vsub.f32 %v512, %v513
        %v515 = vand.u32 %v514, 4294901760
        %516 = vmatpush1.msra.mxu0 %v515
        %v517 = vand.u32 %v372, 4294901760
        %v518 = vsub.f32 %v372, %v517
        %v519 = vand.u32 %v518, 4294901760
        %v520 = vsub.f32 %v518, %v519
        %v521 = vand.u32 %v520, 4294901760
        %522 = vmatprep.subr.mxu0 %v521
        %v523 = vand.u32 %v371, 4294901760
        %v524 = vsub.f32 %v371, %v523
        %v525 = vand.u32 %v524, 4294901760
        %v526 = vsub.f32 %v524, %v525
        %v527 = vand.u32 %v526, 4294901760
        %528 = vmatpush1.msra.mxu0 %v527
        %v529 = vand.u32 %v369, 4294901760
        %v530 = vsub.f32 %v369, %v529
        %v531 = vand.u32 %v530, 4294901760
        %v532 = vsub.f32 %v530, %v531
        %v533 = vand.u32 %v532, 4294901760
        %534 = vmatprep.subr.mxu0 %v533
        %v535 = vand.u32 %v368, 4294901760
        %v536 = vsub.f32 %v368, %v535
        %v537 = vand.u32 %v536, 4294901760
        %v538 = vsub.f32 %v536, %v537
        %v539 = vand.u32 %v538, 4294901760
        %540 = vmatpush1.msra.mxu0 %v539
        %v541 = vand.u32 %v366, 4294901760
        %v542 = vsub.f32 %v366, %v541
        %v543 = vand.u32 %v542, 4294901760
        %v544 = vsub.f32 %v542, %v543
        %v545 = vand.u32 %v544, 4294901760
        %546 = vmatprep.subr.mxu0 %v545
        %v547 = vand.u32 %v365, 4294901760
        %v548 = vsub.f32 %v365, %v547
        %v549 = vand.u32 %v548, 4294901760
        %v550 = vsub.f32 %v548, %v549
        %v551 = vand.u32 %v550, 4294901760
        %552 = vmatpush1.msra.mxu0 %v551
        %v553 = vand.u32 %v363, 4294901760
        %v554 = vsub.f32 %v363, %v553
        %v555 = vand.u32 %v554, 4294901760
        %v556 = vsub.f32 %v554, %v555
        %v557 = vand.u32 %v556, 4294901760
        %558 = vmatprep.subr.mxu0 %v557
        %v559 = vand.u32 %v362, 4294901760
        %v560 = vsub.f32 %v362, %v559
        %v561 = vand.u32 %v560, 4294901760
        %v562 = vsub.f32 %v560, %v561
        %v563 = vand.u32 %v562, 4294901760
        %564 = vmatpush1.msra.mxu0 %v563
        %565 = vmatprep.subr.mxu0 0.0
        %566 = vmatpush2.msra.mxu0 0.0
        %567 = vmatprep.subr.mxu0 0.0
        %568 = vmatpush2.msra.mxu0 0.0
        %569 = vmatprep.subr.mxu0 0.0
        %570 = vmatpush2.msra.mxu0 0.0
        %571 = vmatprep.subr.mxu0 0.0
        %572 = vmatpush2.msra.mxu0 0.0
        %573 = vmatprep.subr.mxu0 0.0
        %574 = vmatpush2.msra.mxu0 0.0
        %575 = vmatprep.subr.mxu0 0.0
        %576 = vmatpush2.msra.mxu0 0.0
        %577 = vmatprep.subr.mxu0 0.0
        %578 = vmatpush2.msra.mxu0 0.0
        %579 = vmatprep.subr.mxu0 0.0
        %580 = vmatpush2.msra.mxu0 0.0
        %581 = vmatprep.subr.mxu0 0.0
        %582 = vmatpush2.msra.mxu0 0.0
        %583 = vmatprep.subr.mxu0 0.0
        %584 = vmatpush2.msra.mxu0 0.0
        %585 = vmatprep.subr.mxu0 0.0
        %586 = vmatpush2.msra.mxu0 0.0
        %587 = vmatprep.subr.mxu0 0.0
        %588 = vmatpush2.msra.mxu0 0.0
        %589 = vmatprep.subr.mxu0 0.0
        %590 = vmatpush2.msra.mxu0 0.0
        %591 = vmatprep.subr.mxu0 0.0
        %592 = vmatpush2.msra.mxu0 0.0
        %593 = vmatprep.subr.mxu0 0.0
        %594 = vmatpush2.msra.mxu0 0.0
        %595 = vmatprep.subr.mxu0 0.0
        %596 = vmatpush2.msra.mxu0 0.0
        %597 = vmatprep.mubr.f32.mxu0 0.0
        %v598 = vand.u32 %v385, 4294901760
        %599 = vmatmul.mubr.f32.gmra.mxu0 %v598
        %v600 = vpop.f32.mrf.mxu0
        %v601 = vadd.f32 %v479, %v600
        %v602 = vpop.f32.mrf.mxu0
        %v603 = vadd.f32 %v481, %v602
        %604 = vdwg.mxu0
        %605 = vmatprep.subr.mxu0 0.0
        %606 = vmatpush1.msra.mxu0 0.0
        %607 = vmatprep.subr.mxu0 0.0
        %608 = vmatpush1.msra.mxu0 0.0
        %609 = vmatprep.subr.mxu0 0.0
        %610 = vmatpush1.msra.mxu0 0.0
        %611 = vmatprep.subr.mxu0 0.0
        %612 = vmatpush1.msra.mxu0 0.0
        %613 = vmatprep.subr.mxu0 0.0
        %614 = vmatpush1.msra.mxu0 0.0
        %615 = vmatprep.subr.mxu0 0.0
        %616 = vmatpush1.msra.mxu0 0.0
        %617 = vmatprep.subr.mxu0 0.0
        %618 = vmatpush1.msra.mxu0 0.0
        %619 = vmatprep.subr.mxu0 0.0
        %620 = vmatpush1.msra.mxu0 0.0
        %621 = vmatprep.subr.mxu0 0.0
        %622 = vmatpush1.msra.mxu0 0.0
        %623 = vmatprep.subr.mxu0 0.0
        %624 = vmatpush1.msra.mxu0 0.0
        %625 = vmatprep.subr.mxu0 0.0
        %626 = vmatpush1.msra.mxu0 0.0
        %v627 = vand.u32 %v392, 4294901760
        %v628 = vsub.f32 %v392, %v627
        %629 = vmatprep.subr.mxu0 %v628
        %v630 = vand.u32 %v389, 4294901760
        %v631 = vsub.f32 %v389, %v630
        %632 = vmatpush1.msra.mxu0 %v631
        %v633 = vand.u32 %v372, 4294901760
        %v634 = vsub.f32 %v372, %v633
        %635 = vmatprep.subr.mxu0 %v634
        %v636 = vand.u32 %v371, 4294901760
        %v637 = vsub.f32 %v371, %v636
        %638 = vmatpush1.msra.mxu0 %v637
        %v639 = vand.u32 %v369, 4294901760
        %v640 = vsub.f32 %v369, %v639
        %641 = vmatprep.subr.mxu0 %v640
        %v642 = vand.u32 %v368, 4294901760
        %v643 = vsub.f32 %v368, %v642
        %644 = vmatpush1.msra.mxu0 %v643
        %v645 = vand.u32 %v366, 4294901760
        %v646 = vsub.f32 %v366, %v645
        %647 = vmatprep.subr.mxu0 %v646
        %v648 = vand.u32 %v365, 4294901760
        %v649 = vsub.f32 %v365, %v648
        %650 = vmatpush1.msra.mxu0 %v649
        %v651 = vand.u32 %v363, 4294901760
        %v652 = vsub.f32 %v363, %v651
        %653 = vmatprep.subr.mxu0 %v652
        %v654 = vand.u32 %v362, 4294901760
        %v655 = vsub.f32 %v362, %v654
        %656 = vmatpush1.msra.mxu0 %v655
        %657 = vmatprep.subr.mxu0 0.0
        %658 = vmatpush2.msra.mxu0 0.0
        %659 = vmatprep.subr.mxu0 0.0
        %660 = vmatpush2.msra.mxu0 0.0
        %661 = vmatprep.subr.mxu0 0.0
        %662 = vmatpush2.msra.mxu0 0.0
        %663 = vmatprep.subr.mxu0 0.0
        %664 = vmatpush2.msra.mxu0 0.0
        %665 = vmatprep.subr.mxu0 0.0
        %666 = vmatpush2.msra.mxu0 0.0
        %667 = vmatprep.subr.mxu0 0.0
        %668 = vmatpush2.msra.mxu0 0.0
        %669 = vmatprep.subr.mxu0 0.0
        %670 = vmatpush2.msra.mxu0 0.0
        %671 = vmatprep.subr.mxu0 0.0
        %672 = vmatpush2.msra.mxu0 0.0
        %673 = vmatprep.subr.mxu0 0.0
        %674 = vmatpush2.msra.mxu0 0.0
        %675 = vmatprep.subr.mxu0 0.0
        %676 = vmatpush2.msra.mxu0 0.0
        %677 = vmatprep.subr.mxu0 0.0
        %678 = vmatpush2.msra.mxu0 0.0
        %679 = vmatprep.subr.mxu0 0.0
        %680 = vmatpush2.msra.mxu0 0.0
        %681 = vmatprep.subr.mxu0 0.0
        %682 = vmatpush2.msra.mxu0 0.0
        %683 = vmatprep.subr.mxu0 0.0
        %684 = vmatpush2.msra.mxu0 0.0
        %685 = vmatprep.subr.mxu0 0.0
        %686 = vmatpush2.msra.mxu0 0.0
        %687 = vmatprep.subr.mxu0 0.0
        %688 = vmatpush2.msra.mxu0 0.0
        %689 = vmatprep.mubr.f32.mxu0 0.0
        %v690 = vand.u32 %v385, 4294901760
        %v691 = vsub.f32 %v385, %v690
        %692 = vmatmul.mubr.f32.gmra.mxu0 %v691
        %v693 = vpop.f32.mrf.mxu0
        %v694 = vadd.f32 %v601, %v693
        %v695 = vpop.f32.mrf.mxu0
        %v696 = vadd.f32 %v603, %v695
        %697 = vdwg.mxu0
        %698 = vmatprep.subr.mxu0 0.0
        %699 = vmatpush1.msra.mxu0 0.0
        %700 = vmatprep.subr.mxu0 0.0
        %701 = vmatpush1.msra.mxu0 0.0
        %702 = vmatprep.subr.mxu0 0.0
        %703 = vmatpush1.msra.mxu0 0.0
        %704 = vmatprep.subr.mxu0 0.0
        %705 = vmatpush1.msra.mxu0 0.0
        %706 = vmatprep.subr.mxu0 0.0
        %707 = vmatpush1.msra.mxu0 0.0
        %708 = vmatprep.subr.mxu0 0.0
        %709 = vmatpush1.msra.mxu0 0.0
        %710 = vmatprep.subr.mxu0 0.0
        %711 = vmatpush1.msra.mxu0 0.0
        %712 = vmatprep.subr.mxu0 0.0
        %713 = vmatpush1.msra.mxu0 0.0
        %714 = vmatprep.subr.mxu0 0.0
        %715 = vmatpush1.msra.mxu0 0.0
        %716 = vmatprep.subr.mxu0 0.0
        %717 = vmatpush1.msra.mxu0 0.0
        %718 = vmatprep.subr.mxu0 0.0
        %719 = vmatpush1.msra.mxu0 0.0
        %v720 = vand.u32 %v392, 4294901760
        %721 = vmatprep.subr.mxu0 %v720
        %v722 = vand.u32 %v389, 4294901760
        %723 = vmatpush1.msra.mxu0 %v722
        %v724 = vand.u32 %v372, 4294901760
        %725 = vmatprep.subr.mxu0 %v724
        %v726 = vand.u32 %v371, 4294901760
        %727 = vmatpush1.msra.mxu0 %v726
        %v728 = vand.u32 %v369, 4294901760
        %729 = vmatprep.subr.mxu0 %v728
        %v730 = vand.u32 %v368, 4294901760
        %731 = vmatpush1.msra.mxu0 %v730
        %v732 = vand.u32 %v366, 4294901760
        %733 = vmatprep.subr.mxu0 %v732
        %v734 = vand.u32 %v365, 4294901760
        %735 = vmatpush1.msra.mxu0 %v734
        %v736 = vand.u32 %v363, 4294901760
        %737 = vmatprep.subr.mxu0 %v736
        %v738 = vand.u32 %v362, 4294901760
        %739 = vmatpush1.msra.mxu0 %v738
        %740 = vmatprep.subr.mxu0 0.0
        %741 = vmatpush2.msra.mxu0 0.0
        %742 = vmatprep.subr.mxu0 0.0
        %743 = vmatpush2.msra.mxu0 0.0
        %744 = vmatprep.subr.mxu0 0.0
        %745 = vmatpush2.msra.mxu0 0.0
        %746 = vmatprep.subr.mxu0 0.0
        %747 = vmatpush2.msra.mxu0 0.0
        %748 = vmatprep.subr.mxu0 0.0
        %749 = vmatpush2.msra.mxu0 0.0
        %750 = vmatprep.subr.mxu0 0.0
        %751 = vmatpush2.msra.mxu0 0.0
        %752 = vmatprep.subr.mxu0 0.0
        %753 = vmatpush2.msra.mxu0 0.0
        %754 = vmatprep.subr.mxu0 0.0
        %755 = vmatpush2.msra.mxu0 0.0
        %756 = vmatprep.subr.mxu0 0.0
        %757 = vmatpush2.msra.mxu0 0.0
        %758 = vmatprep.subr.mxu0 0.0
        %759 = vmatpush2.msra.mxu0 0.0
        %760 = vmatprep.subr.mxu0 0.0
        %761 = vmatpush2.msra.mxu0 0.0
        %762 = vmatprep.subr.mxu0 0.0
        %763 = vmatpush2.msra.mxu0 0.0
        %764 = vmatprep.subr.mxu0 0.0
        %765 = vmatpush2.msra.mxu0 0.0
        %766 = vmatprep.subr.mxu0 0.0
        %767 = vmatpush2.msra.mxu0 0.0
        %768 = vmatprep.subr.mxu0 0.0
        %769 = vmatpush2.msra.mxu0 0.0
        %770 = vmatprep.subr.mxu0 0.0
        %771 = vmatpush2.msra.mxu0 0.0
        %772 = vmatprep.mubr.f32.mxu0 0.0
        %v773 = vand.u32 %v385, 4294901760
        %v774 = vsub.f32 %v385, %v773
        %v775 = vand.u32 %v774, 4294901760
        %776 = vmatmul.mubr.f32.gmra.mxu0 %v775
        %v777 = vpop.f32.mrf.mxu0
        %v778 = vadd.f32 %v694, %v777
        %v779 = vpop.f32.mrf.mxu0
        %v780 = vadd.f32 %v696, %v779
        %781 = vdwg.mxu0
        %782 = vmatprep.subr.mxu0 0.0
        %783 = vmatpush1.msra.mxu0 0.0
        %784 = vmatprep.subr.mxu0 0.0
        %785 = vmatpush1.msra.mxu0 0.0
        %786 = vmatprep.subr.mxu0 0.0
        %787 = vmatpush1.msra.mxu0 0.0
        %788 = vmatprep.subr.mxu0 0.0
        %789 = vmatpush1.msra.mxu0 0.0
        %790 = vmatprep.subr.mxu0 0.0
        %791 = vmatpush1.msra.mxu0 0.0
        %792 = vmatprep.subr.mxu0 0.0
        %793 = vmatpush1.msra.mxu0 0.0
        %794 = vmatprep.subr.mxu0 0.0
        %795 = vmatpush1.msra.mxu0 0.0
        %796 = vmatprep.subr.mxu0 0.0
        %797 = vmatpush1.msra.mxu0 0.0
        %798 = vmatprep.subr.mxu0 0.0
        %799 = vmatpush1.msra.mxu0 0.0
        %800 = vmatprep.subr.mxu0 0.0
        %801 = vmatpush1.msra.mxu0 0.0
        %802 = vmatprep.subr.mxu0 0.0
        %803 = vmatpush1.msra.mxu0 0.0
        %v804 = vand.u32 %v392, 4294901760
        %v805 = vsub.f32 %v392, %v804
        %v806 = vand.u32 %v805, 4294901760
        %807 = vmatprep.subr.mxu0 %v806
        %v808 = vand.u32 %v389, 4294901760
        %v809 = vsub.f32 %v389, %v808
        %v810 = vand.u32 %v809, 4294901760
        %811 = vmatpush1.msra.mxu0 %v810
        %v812 = vand.u32 %v372, 4294901760
        %v813 = vsub.f32 %v372, %v812
        %v814 = vand.u32 %v813, 4294901760
        %815 = vmatprep.subr.mxu0 %v814
        %v816 = vand.u32 %v371, 4294901760
        %v817 = vsub.f32 %v371, %v816
        %v818 = vand.u32 %v817, 4294901760
        %819 = vmatpush1.msra.mxu0 %v818
        %v820 = vand.u32 %v369, 4294901760
        %v821 = vsub.f32 %v369, %v820
        %v822 = vand.u32 %v821, 4294901760
        %823 = vmatprep.subr.mxu0 %v822
        %v824 = vand.u32 %v368, 4294901760
        %v825 = vsub.f32 %v368, %v824
        %v826 = vand.u32 %v825, 4294901760
        %827 = vmatpush1.msra.mxu0 %v826
        %v828 = vand.u32 %v366, 4294901760
        %v829 = vsub.f32 %v366, %v828
        %v830 = vand.u32 %v829, 4294901760
        %831 = vmatprep.subr.mxu0 %v830
        %v832 = vand.u32 %v365, 4294901760
        %v833 = vsub.f32 %v365, %v832
        %v834 = vand.u32 %v833, 4294901760
        %835 = vmatpush1.msra.mxu0 %v834
        %v836 = vand.u32 %v363, 4294901760
        %v837 = vsub.f32 %v363, %v836
        %v838 = vand.u32 %v837, 4294901760
        %839 = vmatprep.subr.mxu0 %v838
        %v840 = vand.u32 %v362, 4294901760
        %v841 = vsub.f32 %v362, %v840
        %v842 = vand.u32 %v841, 4294901760
        %843 = vmatpush1.msra.mxu0 %v842
        %844 = vmatprep.subr.mxu0 0.0
        %845 = vmatpush2.msra.mxu0 0.0
        %846 = vmatprep.subr.mxu0 0.0
        %847 = vmatpush2.msra.mxu0 0.0
        %848 = vmatprep.subr.mxu0 0.0
        %849 = vmatpush2.msra.mxu0 0.0
        %850 = vmatprep.subr.mxu0 0.0
        %851 = vmatpush2.msra.mxu0 0.0
        %852 = vmatprep.subr.mxu0 0.0
        %853 = vmatpush2.msra.mxu0 0.0
        %854 = vmatprep.subr.mxu0 0.0
        %855 = vmatpush2.msra.mxu0 0.0
        %856 = vmatprep.subr.mxu0 0.0
        %857 = vmatpush2.msra.mxu0 0.0
        %858 = vmatprep.subr.mxu0 0.0
        %859 = vmatpush2.msra.mxu0 0.0
        %860 = vmatprep.subr.mxu0 0.0
        %861 = vmatpush2.msra.mxu0 0.0
        %862 = vmatprep.subr.mxu0 0.0
        %863 = vmatpush2.msra.mxu0 0.0
        %864 = vmatprep.subr.mxu0 0.0
        %865 = vmatpush2.msra.mxu0 0.0
        %866 = vmatprep.subr.mxu0 0.0
        %867 = vmatpush2.msra.mxu0 0.0
        %868 = vmatprep.subr.mxu0 0.0
        %869 = vmatpush2.msra.mxu0 0.0
        %870 = vmatprep.subr.mxu0 0.0
        %871 = vmatpush2.msra.mxu0 0.0
        %872 = vmatprep.subr.mxu0 0.0
        %873 = vmatpush2.msra.mxu0 0.0
        %874 = vmatprep.subr.mxu0 0.0
        %875 = vmatpush2.msra.mxu0 0.0
        %876 = vmatprep.mubr.f32.mxu0 0.0
        %v877 = vand.u32 %v385, 4294901760
        %878 = vmatmul.mubr.f32.gmra.mxu0 %v877
        %v879 = vpop.f32.mrf.mxu0
        %v880 = vadd.f32 %v778, %v879
        %v881 = vpop.f32.mrf.mxu0
        %v882 = vadd.f32 %v780, %v881
        %883 = vdwg.mxu0
        %884 = vmatprep.subr.mxu0 0.0
        %885 = vmatpush1.msra.mxu0 0.0
        %886 = vmatprep.subr.mxu0 0.0
        %887 = vmatpush1.msra.mxu0 0.0
        %888 = vmatprep.subr.mxu0 0.0
        %889 = vmatpush1.msra.mxu0 0.0
        %890 = vmatprep.subr.mxu0 0.0
        %891 = vmatpush1.msra.mxu0 0.0
        %892 = vmatprep.subr.mxu0 0.0
        %893 = vmatpush1.msra.mxu0 0.0
        %894 = vmatprep.subr.mxu0 0.0
        %895 = vmatpush1.msra.mxu0 0.0
        %896 = vmatprep.subr.mxu0 0.0
        %897 = vmatpush1.msra.mxu0 0.0
        %898 = vmatprep.subr.mxu0 0.0
        %899 = vmatpush1.msra.mxu0 0.0
        %900 = vmatprep.subr.mxu0 0.0
        %901 = vmatpush1.msra.mxu0 0.0
        %902 = vmatprep.subr.mxu0 0.0
        %903 = vmatpush1.msra.mxu0 0.0
        %904 = vmatprep.subr.mxu0 0.0
        %905 = vmatpush1.msra.mxu0 0.0
        %v906 = vand.u32 %v392, 4294901760
        %907 = vmatprep.subr.mxu0 %v906
        %v908 = vand.u32 %v389, 4294901760
        %909 = vmatpush1.msra.mxu0 %v908
        %v910 = vand.u32 %v372, 4294901760
        %911 = vmatprep.subr.mxu0 %v910
        %v912 = vand.u32 %v371, 4294901760
        %913 = vmatpush1.msra.mxu0 %v912
        %v914 = vand.u32 %v369, 4294901760
        %915 = vmatprep.subr.mxu0 %v914
        %v916 = vand.u32 %v368, 4294901760
        %917 = vmatpush1.msra.mxu0 %v916
        %v918 = vand.u32 %v366, 4294901760
        %919 = vmatprep.subr.mxu0 %v918
        %v920 = vand.u32 %v365, 4294901760
        %921 = vmatpush1.msra.mxu0 %v920
        %v922 = vand.u32 %v363, 4294901760
        %923 = vmatprep.subr.mxu0 %v922
        %v924 = vand.u32 %v362, 4294901760
        %925 = vmatpush1.msra.mxu0 %v924
        %926 = vmatprep.subr.mxu0 0.0
        %927 = vmatpush2.msra.mxu0 0.0
        %928 = vmatprep.subr.mxu0 0.0
        %929 = vmatpush2.msra.mxu0 0.0
        %930 = vmatprep.subr.mxu0 0.0
        %931 = vmatpush2.msra.mxu0 0.0
        %932 = vmatprep.subr.mxu0 0.0
        %933 = vmatpush2.msra.mxu0 0.0
        %934 = vmatprep.subr.mxu0 0.0
        %935 = vmatpush2.msra.mxu0 0.0
        %936 = vmatprep.subr.mxu0 0.0
        %937 = vmatpush2.msra.mxu0 0.0
        %938 = vmatprep.subr.mxu0 0.0
        %939 = vmatpush2.msra.mxu0 0.0
        %940 = vmatprep.subr.mxu0 0.0
        %941 = vmatpush2.msra.mxu0 0.0
        %942 = vmatprep.subr.mxu0 0.0
        %943 = vmatpush2.msra.mxu0 0.0
        %944 = vmatprep.subr.mxu0 0.0
        %945 = vmatpush2.msra.mxu0 0.0
        %946 = vmatprep.subr.mxu0 0.0
        %947 = vmatpush2.msra.mxu0 0.0
        %948 = vmatprep.subr.mxu0 0.0
        %949 = vmatpush2.msra.mxu0 0.0
        %950 = vmatprep.subr.mxu0 0.0
        %951 = vmatpush2.msra.mxu0 0.0
        %952 = vmatprep.subr.mxu0 0.0
        %953 = vmatpush2.msra.mxu0 0.0
        %954 = vmatprep.subr.mxu0 0.0
        %955 = vmatpush2.msra.mxu0 0.0
        %956 = vmatprep.subr.mxu0 0.0
        %957 = vmatpush2.msra.mxu0 0.0
        %958 = vmatprep.mubr.f32.mxu0 0.0
        %v959 = vand.u32 %v385, 4294901760
        %960 = vmatmul.mubr.f32.gmra.mxu0 %v959
        %v961 = vpop.f32.mrf.mxu0
        %v962 = vadd.f32 %v880, %v961
        %v963 = vpop.f32.mrf.mxu0
        %v964 = vadd.f32 %v882, %v963
        %965 = vdwg.mxu0
        %966 = vmatprep.subr.mxu0 0.0
        %967 = vmatpush1.msra.mxu0 0.0
        %968 = vmatprep.subr.mxu0 0.0
        %969 = vmatpush1.msra.mxu0 0.0
        %970 = vmatprep.subr.mxu0 0.0
        %971 = vmatpush1.msra.mxu0 0.0
        %972 = vmatprep.subr.mxu0 0.0
        %973 = vmatpush1.msra.mxu0 0.0
        %974 = vmatprep.subr.mxu0 0.0
        %975 = vmatpush1.msra.mxu0 0.0
        %976 = vmatprep.subr.mxu0 0.0
        %977 = vmatpush1.msra.mxu0 0.0
        %978 = vmatprep.subr.mxu0 0.0
        %979 = vmatpush1.msra.mxu0 0.0
        %980 = vmatprep.subr.mxu0 0.0
        %981 = vmatpush1.msra.mxu0 0.0
        %982 = vmatprep.subr.mxu0 0.0
        %983 = vmatpush1.msra.mxu0 0.0
        %984 = vmatprep.subr.mxu0 0.0
        %985 = vmatpush1.msra.mxu0 0.0
        %986 = vmatprep.subr.mxu0 0.0
        %987 = vmatpush1.msra.mxu0 0.0
        %988 = vmatprep.subr.mxu0 0.0
        %v989 = vand.u32 %v395, 4294901760
        %990 = vmatpush1.msra.mxu0 %v989
        %991 = vmatprep.subr.mxu0 0.0
        %v992 = vand.u32 %v373, 4294901760
        %993 = vmatpush1.msra.mxu0 %v992
        %994 = vmatprep.subr.mxu0 0.0
        %v995 = vand.u32 %v370, 4294901760
        %996 = vmatpush1.msra.mxu0 %v995
        %997 = vmatprep.subr.mxu0 0.0
        %v998 = vand.u32 %v367, 4294901760
        %999 = vmatpush1.msra.mxu0 %v998
        %1000 = vmatprep.subr.mxu0 0.0
        %v1001 = vand.u32 %v364, 4294901760
        %1002 = vmatpush1.msra.mxu0 %v1001
        %1003 = vmatprep.subr.mxu0 0.0
        %1004 = vmatpush2.msra.mxu0 0.0
        %1005 = vmatprep.subr.mxu0 0.0
        %1006 = vmatpush2.msra.mxu0 0.0
        %1007 = vmatprep.subr.mxu0 0.0
        %1008 = vmatpush2.msra.mxu0 0.0
        %1009 = vmatprep.subr.mxu0 0.0
        %1010 = vmatpush2.msra.mxu0 0.0
        %1011 = vmatprep.subr.mxu0 0.0
        %1012 = vmatpush2.msra.mxu0 0.0
        %1013 = vmatprep.subr.mxu0 0.0
        %1014 = vmatpush2.msra.mxu0 0.0
        %1015 = vmatprep.subr.mxu0 0.0
        %1016 = vmatpush2.msra.mxu0 0.0
        %1017 = vmatprep.subr.mxu0 0.0
        %1018 = vmatpush2.msra.mxu0 0.0
        %1019 = vmatprep.subr.mxu0 0.0
        %1020 = vmatpush2.msra.mxu0 0.0
        %1021 = vmatprep.subr.mxu0 0.0
        %1022 = vmatpush2.msra.mxu0 0.0
        %1023 = vmatprep.subr.mxu0 0.0
        %1024 = vmatpush2.msra.mxu0 0.0
        %1025 = vmatprep.subr.mxu0 0.0
        %1026 = vmatpush2.msra.mxu0 0.0
        %1027 = vmatprep.subr.mxu0 0.0
        %1028 = vmatpush2.msra.mxu0 0.0
        %1029 = vmatprep.subr.mxu0 0.0
        %1030 = vmatpush2.msra.mxu0 0.0
        %1031 = vmatprep.subr.mxu0 0.0
        %1032 = vmatpush2.msra.mxu0 0.0
        %1033 = vmatprep.subr.mxu0 0.0
        %1034 = vmatpush2.msra.mxu0 0.0
        %1035 = vmatprep.mubr.f32.mxu0 0.0
        %v1036 = vand.u32 %v385, 4294901760
        %v1037 = vsub.f32 %v385, %v1036
        %v1038 = vand.u32 %v1037, 4294901760
        %v1039 = vsub.f32 %v1037, %v1038
        %v1040 = vand.u32 %v1039, 4294901760
        %1041 = vmatmul.mubr.f32.gmra.mxu0 %v1040
        %v1042 = vpop.f32.mrf.mxu0
        %v1043 = vadd.f32 %v381, %v1042
        %v1044 = vpop.f32.mrf.mxu0
        %1045 = vdwg.mxu0
        %1046 = vmatprep.subr.mxu0 0.0
        %1047 = vmatpush1.msra.mxu0 0.0
        %1048 = vmatprep.subr.mxu0 0.0
        %1049 = vmatpush1.msra.mxu0 0.0
        %1050 = vmatprep.subr.mxu0 0.0
        %1051 = vmatpush1.msra.mxu0 0.0
        %1052 = vmatprep.subr.mxu0 0.0
        %1053 = vmatpush1.msra.mxu0 0.0
        %1054 = vmatprep.subr.mxu0 0.0
        %1055 = vmatpush1.msra.mxu0 0.0
        %1056 = vmatprep.subr.mxu0 0.0
        %1057 = vmatpush1.msra.mxu0 0.0
        %1058 = vmatprep.subr.mxu0 0.0
        %1059 = vmatpush1.msra.mxu0 0.0
        %1060 = vmatprep.subr.mxu0 0.0
        %1061 = vmatpush1.msra.mxu0 0.0
        %1062 = vmatprep.subr.mxu0 0.0
        %1063 = vmatpush1.msra.mxu0 0.0
        %1064 = vmatprep.subr.mxu0 0.0
        %1065 = vmatpush1.msra.mxu0 0.0
        %1066 = vmatprep.subr.mxu0 0.0
        %1067 = vmatpush1.msra.mxu0 0.0
        %1068 = vmatprep.subr.mxu0 0.0
        %v1069 = vand.u32 %v395, 4294901760
        %v1070 = vsub.f32 %v395, %v1069
        %v1071 = vand.u32 %v1070, 4294901760
        %v1072 = vsub.f32 %v1070, %v1071
        %v1073 = vand.u32 %v1072, 4294901760
        %1074 = vmatpush1.msra.mxu0 %v1073
        %1075 = vmatprep.subr.mxu0 0.0
        %v1076 = vand.u32 %v373, 4294901760
        %v1077 = vsub.f32 %v373, %v1076
        %v1078 = vand.u32 %v1077, 4294901760
        %v1079 = vsub.f32 %v1077, %v1078
        %v1080 = vand.u32 %v1079, 4294901760
        %1081 = vmatpush1.msra.mxu0 %v1080
        %1082 = vmatprep.subr.mxu0 0.0
        %v1083 = vand.u32 %v370, 4294901760
        %v1084 = vsub.f32 %v370, %v1083
        %v1085 = vand.u32 %v1084, 4294901760
        %v1086 = vsub.f32 %v1084, %v1085
        %v1087 = vand.u32 %v1086, 4294901760
        %1088 = vmatpush1.msra.mxu0 %v1087
        %1089 = vmatprep.subr.mxu0 0.0
        %v1090 = vand.u32 %v367, 4294901760
        %v1091 = vsub.f32 %v367, %v1090
        %v1092 = vand.u32 %v1091, 4294901760
        %v1093 = vsub.f32 %v1091, %v1092
        %v1094 = vand.u32 %v1093, 4294901760
        %1095 = vmatpush1.msra.mxu0 %v1094
        %1096 = vmatprep.subr.mxu0 0.0
        %v1097 = vand.u32 %v364, 4294901760
        %v1098 = vsub.f32 %v364, %v1097
        %v1099 = vand.u32 %v1098, 4294901760
        %v1100 = vsub.f32 %v1098, %v1099
        %v1101 = vand.u32 %v1100, 4294901760
        %1102 = vmatpush1.msra.mxu0 %v1101
        %1103 = vmatprep.subr.mxu0 0.0
        %1104 = vmatpush2.msra.mxu0 0.0
        %1105 = vmatprep.subr.mxu0 0.0
        %1106 = vmatpush2.msra.mxu0 0.0
        %1107 = vmatprep.subr.mxu0 0.0
        %1108 = vmatpush2.msra.mxu0 0.0
        %1109 = vmatprep.subr.mxu0 0.0
        %1110 = vmatpush2.msra.mxu0 0.0
        %1111 = vmatprep.subr.mxu0 0.0
        %1112 = vmatpush2.msra.mxu0 0.0
        %1113 = vmatprep.subr.mxu0 0.0
        %1114 = vmatpush2.msra.mxu0 0.0
        %1115 = vmatprep.subr.mxu0 0.0
        %1116 = vmatpush2.msra.mxu0 0.0
        %1117 = vmatprep.subr.mxu0 0.0
        %1118 = vmatpush2.msra.mxu0 0.0
        %1119 = vmatprep.subr.mxu0 0.0
        %1120 = vmatpush2.msra.mxu0 0.0
        %1121 = vmatprep.subr.mxu0 0.0
        %1122 = vmatpush2.msra.mxu0 0.0
        %1123 = vmatprep.subr.mxu0 0.0
        %1124 = vmatpush2.msra.mxu0 0.0
        %1125 = vmatprep.subr.mxu0 0.0
        %1126 = vmatpush2.msra.mxu0 0.0
        %1127 = vmatprep.subr.mxu0 0.0
        %1128 = vmatpush2.msra.mxu0 0.0
        %1129 = vmatprep.subr.mxu0 0.0
        %1130 = vmatpush2.msra.mxu0 0.0
        %1131 = vmatprep.subr.mxu0 0.0
        %1132 = vmatpush2.msra.mxu0 0.0
        %1133 = vmatprep.subr.mxu0 0.0
        %1134 = vmatpush2.msra.mxu0 0.0
        %1135 = vmatprep.mubr.f32.mxu0 0.0
        %v1136 = vand.u32 %v385, 4294901760
        %1137 = vmatmul.mubr.f32.gmra.mxu0 %v1136
        %v1138 = vpop.f32.mrf.mxu0
        %v1139 = vadd.f32 %v1043, %v1138
        %v1140 = vpop.f32.mrf.mxu0
        %1141 = vdwg.mxu0
        %1142 = vmatprep.subr.mxu0 0.0
        %1143 = vmatpush1.msra.mxu0 0.0
        %1144 = vmatprep.subr.mxu0 0.0
        %1145 = vmatpush1.msra.mxu0 0.0
        %1146 = vmatprep.subr.mxu0 0.0
        %1147 = vmatpush1.msra.mxu0 0.0
        %1148 = vmatprep.subr.mxu0 0.0
        %1149 = vmatpush1.msra.mxu0 0.0
        %1150 = vmatprep.subr.mxu0 0.0
        %1151 = vmatpush1.msra.mxu0 0.0
        %1152 = vmatprep.subr.mxu0 0.0
        %1153 = vmatpush1.msra.mxu0 0.0
        %1154 = vmatprep.subr.mxu0 0.0
        %1155 = vmatpush1.msra.mxu0 0.0
        %1156 = vmatprep.subr.mxu0 0.0
        %1157 = vmatpush1.msra.mxu0 0.0
        %1158 = vmatprep.subr.mxu0 0.0
        %1159 = vmatpush1.msra.mxu0 0.0
        %1160 = vmatprep.subr.mxu0 0.0
        %1161 = vmatpush1.msra.mxu0 0.0
        %1162 = vmatprep.subr.mxu0 0.0
        %1163 = vmatpush1.msra.mxu0 0.0
        %1164 = vmatprep.subr.mxu0 0.0
        %v1165 = vand.u32 %v395, 4294901760
        %v1166 = vsub.f32 %v395, %v1165
        %1167 = vmatpush1.msra.mxu0 %v1166
        %1168 = vmatprep.subr.mxu0 0.0
        %v1169 = vand.u32 %v373, 4294901760
        %v1170 = vsub.f32 %v373, %v1169
        %1171 = vmatpush1.msra.mxu0 %v1170
        %1172 = vmatprep.subr.mxu0 0.0
        %v1173 = vand.u32 %v370, 4294901760
        %v1174 = vsub.f32 %v370, %v1173
        %1175 = vmatpush1.msra.mxu0 %v1174
        %1176 = vmatprep.subr.mxu0 0.0
        %v1177 = vand.u32 %v367, 4294901760
        %v1178 = vsub.f32 %v367, %v1177
        %1179 = vmatpush1.msra.mxu0 %v1178
        %1180 = vmatprep.subr.mxu0 0.0
        %v1181 = vand.u32 %v364, 4294901760
        %v1182 = vsub.f32 %v364, %v1181
        %1183 = vmatpush1.msra.mxu0 %v1182
        %1184 = vmatprep.subr.mxu0 0.0
        %1185 = vmatpush2.msra.mxu0 0.0
        %1186 = vmatprep.subr.mxu0 0.0
        %1187 = vmatpush2.msra.mxu0 0.0
        %1188 = vmatprep.subr.mxu0 0.0
        %1189 = vmatpush2.msra.mxu0 0.0
        %1190 = vmatprep.subr.mxu0 0.0
        %1191 = vmatpush2.msra.mxu0 0.0
        %1192 = vmatprep.subr.mxu0 0.0
        %1193 = vmatpush2.msra.mxu0 0.0
        %1194 = vmatprep.subr.mxu0 0.0
        %1195 = vmatpush2.msra.mxu0 0.0
        %1196 = vmatprep.subr.mxu0 0.0
        %1197 = vmatpush2.msra.mxu0 0.0
        %1198 = vmatprep.subr.mxu0 0.0
        %1199 = vmatpush2.msra.mxu0 0.0
        %1200 = vmatprep.subr.mxu0 0.0
        %1201 = vmatpush2.msra.mxu0 0.0
        %1202 = vmatprep.subr.mxu0 0.0
        %1203 = vmatpush2.msra.mxu0 0.0
        %1204 = vmatprep.subr.mxu0 0.0
        %1205 = vmatpush2.msra.mxu0 0.0
        %1206 = vmatprep.subr.mxu0 0.0
        %1207 = vmatpush2.msra.mxu0 0.0
        %1208 = vmatprep.subr.mxu0 0.0
        %1209 = vmatpush2.msra.mxu0 0.0
        %1210 = vmatprep.subr.mxu0 0.0
        %1211 = vmatpush2.msra.mxu0 0.0
        %1212 = vmatprep.subr.mxu0 0.0
        %1213 = vmatpush2.msra.mxu0 0.0
        %1214 = vmatprep.subr.mxu0 0.0
        %1215 = vmatpush2.msra.mxu0 0.0
        %1216 = vmatprep.mubr.f32.mxu0 0.0
        %v1217 = vand.u32 %v385, 4294901760
        %v1218 = vsub.f32 %v385, %v1217
        %1219 = vmatmul.mubr.f32.gmra.mxu0 %v1218
        %v1220 = vpop.f32.mrf.mxu0
        %v1221 = vadd.f32 %v1139, %v1220
        %v1222 = vpop.f32.mrf.mxu0
        %1223 = vdwg.mxu0
        %1224 = vmatprep.subr.mxu0 0.0
        %1225 = vmatpush1.msra.mxu0 0.0
        %1226 = vmatprep.subr.mxu0 0.0
        %1227 = vmatpush1.msra.mxu0 0.0
        %1228 = vmatprep.subr.mxu0 0.0
        %1229 = vmatpush1.msra.mxu0 0.0
        %1230 = vmatprep.subr.mxu0 0.0
        %1231 = vmatpush1.msra.mxu0 0.0
        %1232 = vmatprep.subr.mxu0 0.0
        %1233 = vmatpush1.msra.mxu0 0.0
        %1234 = vmatprep.subr.mxu0 0.0
        %1235 = vmatpush1.msra.mxu0 0.0
        %1236 = vmatprep.subr.mxu0 0.0
        %1237 = vmatpush1.msra.mxu0 0.0
        %1238 = vmatprep.subr.mxu0 0.0
        %1239 = vmatpush1.msra.mxu0 0.0
        %1240 = vmatprep.subr.mxu0 0.0
        %1241 = vmatpush1.msra.mxu0 0.0
        %1242 = vmatprep.subr.mxu0 0.0
        %1243 = vmatpush1.msra.mxu0 0.0
        %1244 = vmatprep.subr.mxu0 0.0
        %1245 = vmatpush1.msra.mxu0 0.0
        %1246 = vmatprep.subr.mxu0 0.0
        %v1247 = vand.u32 %v395, 4294901760
        %1248 = vmatpush1.msra.mxu0 %v1247
        %1249 = vmatprep.subr.mxu0 0.0
        %v1250 = vand.u32 %v373, 4294901760
        %1251 = vmatpush1.msra.mxu0 %v1250
        %1252 = vmatprep.subr.mxu0 0.0
        %v1253 = vand.u32 %v370, 4294901760
        %1254 = vmatpush1.msra.mxu0 %v1253
        %1255 = vmatprep.subr.mxu0 0.0
        %v1256 = vand.u32 %v367, 4294901760
        %1257 = vmatpush1.msra.mxu0 %v1256
        %1258 = vmatprep.subr.mxu0 0.0
        %v1259 = vand.u32 %v364, 4294901760
        %1260 = vmatpush1.msra.mxu0 %v1259
        %1261 = vmatprep.subr.mxu0 0.0
        %1262 = vmatpush2.msra.mxu0 0.0
        %1263 = vmatprep.subr.mxu0 0.0
        %1264 = vmatpush2.msra.mxu0 0.0
        %1265 = vmatprep.subr.mxu0 0.0
        %1266 = vmatpush2.msra.mxu0 0.0
        %1267 = vmatprep.subr.mxu0 0.0
        %1268 = vmatpush2.msra.mxu0 0.0
        %1269 = vmatprep.subr.mxu0 0.0
        %1270 = vmatpush2.msra.mxu0 0.0
        %1271 = vmatprep.subr.mxu0 0.0
        %1272 = vmatpush2.msra.mxu0 0.0
        %1273 = vmatprep.subr.mxu0 0.0
        %1274 = vmatpush2.msra.mxu0 0.0
        %1275 = vmatprep.subr.mxu0 0.0
        %1276 = vmatpush2.msra.mxu0 0.0
        %1277 = vmatprep.subr.mxu0 0.0
        %1278 = vmatpush2.msra.mxu0 0.0
        %1279 = vmatprep.subr.mxu0 0.0
        %1280 = vmatpush2.msra.mxu0 0.0
        %1281 = vmatprep.subr.mxu0 0.0
        %1282 = vmatpush2.msra.mxu0 0.0
        %1283 = vmatprep.subr.mxu0 0.0
        %1284 = vmatpush2.msra.mxu0 0.0
        %1285 = vmatprep.subr.mxu0 0.0
        %1286 = vmatpush2.msra.mxu0 0.0
        %1287 = vmatprep.subr.mxu0 0.0
        %1288 = vmatpush2.msra.mxu0 0.0
        %1289 = vmatprep.subr.mxu0 0.0
        %1290 = vmatpush2.msra.mxu0 0.0
        %1291 = vmatprep.subr.mxu0 0.0
        %1292 = vmatpush2.msra.mxu0 0.0
        %1293 = vmatprep.mubr.f32.mxu0 0.0
        %v1294 = vand.u32 %v385, 4294901760
        %v1295 = vsub.f32 %v385, %v1294
        %v1296 = vand.u32 %v1295, 4294901760
        %1297 = vmatmul.mubr.f32.gmra.mxu0 %v1296
        %v1298 = vpop.f32.mrf.mxu0
        %v1299 = vadd.f32 %v1221, %v1298
        %v1300 = vpop.f32.mrf.mxu0
        %1301 = vdwg.mxu0
        %1302 = vmatprep.subr.mxu0 0.0
        %1303 = vmatpush1.msra.mxu0 0.0
        %1304 = vmatprep.subr.mxu0 0.0
        %1305 = vmatpush1.msra.mxu0 0.0
        %1306 = vmatprep.subr.mxu0 0.0
        %1307 = vmatpush1.msra.mxu0 0.0
        %1308 = vmatprep.subr.mxu0 0.0
        %1309 = vmatpush1.msra.mxu0 0.0
        %1310 = vmatprep.subr.mxu0 0.0
        %1311 = vmatpush1.msra.mxu0 0.0
        %1312 = vmatprep.subr.mxu0 0.0
        %1313 = vmatpush1.msra.mxu0 0.0
        %1314 = vmatprep.subr.mxu0 0.0
        %1315 = vmatpush1.msra.mxu0 0.0
        %1316 = vmatprep.subr.mxu0 0.0
        %1317 = vmatpush1.msra.mxu0 0.0
        %1318 = vmatprep.subr.mxu0 0.0
        %1319 = vmatpush1.msra.mxu0 0.0
        %1320 = vmatprep.subr.mxu0 0.0
        %1321 = vmatpush1.msra.mxu0 0.0
        %1322 = vmatprep.subr.mxu0 0.0
        %1323 = vmatpush1.msra.mxu0 0.0
        %1324 = vmatprep.subr.mxu0 0.0
        %v1325 = vand.u32 %v395, 4294901760
        %v1326 = vsub.f32 %v395, %v1325
        %v1327 = vand.u32 %v1326, 4294901760
        %1328 = vmatpush1.msra.mxu0 %v1327
        %1329 = vmatprep.subr.mxu0 0.0
        %v1330 = vand.u32 %v373, 4294901760
        %v1331 = vsub.f32 %v373, %v1330
        %v1332 = vand.u32 %v1331, 4294901760
        %1333 = vmatpush1.msra.mxu0 %v1332
        %1334 = vmatprep.subr.mxu0 0.0
        %v1335 = vand.u32 %v370, 4294901760
        %v1336 = vsub.f32 %v370, %v1335
        %v1337 = vand.u32 %v1336, 4294901760
        %1338 = vmatpush1.msra.mxu0 %v1337
        %1339 = vmatprep.subr.mxu0 0.0
        %v1340 = vand.u32 %v367, 4294901760
        %v1341 = vsub.f32 %v367, %v1340
        %v1342 = vand.u32 %v1341, 4294901760
        %1343 = vmatpush1.msra.mxu0 %v1342
        %1344 = vmatprep.subr.mxu0 0.0
        %v1345 = vand.u32 %v364, 4294901760
        %v1346 = vsub.f32 %v364, %v1345
        %v1347 = vand.u32 %v1346, 4294901760
        %1348 = vmatpush1.msra.mxu0 %v1347
        %1349 = vmatprep.subr.mxu0 0.0
        %1350 = vmatpush2.msra.mxu0 0.0
        %1351 = vmatprep.subr.mxu0 0.0
        %1352 = vmatpush2.msra.mxu0 0.0
        %1353 = vmatprep.subr.mxu0 0.0
        %1354 = vmatpush2.msra.mxu0 0.0
        %1355 = vmatprep.subr.mxu0 0.0
        %1356 = vmatpush2.msra.mxu0 0.0
        %1357 = vmatprep.subr.mxu0 0.0
        %1358 = vmatpush2.msra.mxu0 0.0
        %1359 = vmatprep.subr.mxu0 0.0
        %1360 = vmatpush2.msra.mxu0 0.0
        %1361 = vmatprep.subr.mxu0 0.0
        %1362 = vmatpush2.msra.mxu0 0.0
        %1363 = vmatprep.subr.mxu0 0.0
        %1364 = vmatpush2.msra.mxu0 0.0
        %1365 = vmatprep.subr.mxu0 0.0
        %1366 = vmatpush2.msra.mxu0 0.0
        %1367 = vmatprep.subr.mxu0 0.0
        %1368 = vmatpush2.msra.mxu0 0.0
        %1369 = vmatprep.subr.mxu0 0.0
        %1370 = vmatpush2.msra.mxu0 0.0
        %1371 = vmatprep.subr.mxu0 0.0
        %1372 = vmatpush2.msra.mxu0 0.0
        %1373 = vmatprep.subr.mxu0 0.0
        %1374 = vmatpush2.msra.mxu0 0.0
        %1375 = vmatprep.subr.mxu0 0.0
        %1376 = vmatpush2.msra.mxu0 0.0
        %1377 = vmatprep.subr.mxu0 0.0
        %1378 = vmatpush2.msra.mxu0 0.0
        %1379 = vmatprep.subr.mxu0 0.0
        %1380 = vmatpush2.msra.mxu0 0.0
        %1381 = vmatprep.mubr.f32.mxu0 0.0
        %v1382 = vand.u32 %v385, 4294901760
        %1383 = vmatmul.mubr.f32.gmra.mxu0 %v1382
        %v1384 = vpop.f32.mrf.mxu0
        %v1385 = vadd.f32 %v1299, %v1384
        %v1386 = vpop.f32.mrf.mxu0
        %1387 = vdwg.mxu0
        %1388 = vmatprep.subr.mxu0 0.0
        %1389 = vmatpush1.msra.mxu0 0.0
        %1390 = vmatprep.subr.mxu0 0.0
        %1391 = vmatpush1.msra.mxu0 0.0
        %1392 = vmatprep.subr.mxu0 0.0
        %1393 = vmatpush1.msra.mxu0 0.0
        %1394 = vmatprep.subr.mxu0 0.0
        %1395 = vmatpush1.msra.mxu0 0.0
        %1396 = vmatprep.subr.mxu0 0.0
        %1397 = vmatpush1.msra.mxu0 0.0
        %1398 = vmatprep.subr.mxu0 0.0
        %1399 = vmatpush1.msra.mxu0 0.0
        %1400 = vmatprep.subr.mxu0 0.0
        %1401 = vmatpush1.msra.mxu0 0.0
        %1402 = vmatprep.subr.mxu0 0.0
        %1403 = vmatpush1.msra.mxu0 0.0
        %1404 = vmatprep.subr.mxu0 0.0
        %1405 = vmatpush1.msra.mxu0 0.0
        %1406 = vmatprep.subr.mxu0 0.0
        %1407 = vmatpush1.msra.mxu0 0.0
        %1408 = vmatprep.subr.mxu0 0.0
        %1409 = vmatpush1.msra.mxu0 0.0
        %1410 = vmatprep.subr.mxu0 0.0
        %v1411 = vand.u32 %v395, 4294901760
        %1412 = vmatpush1.msra.mxu0 %v1411
        %1413 = vmatprep.subr.mxu0 0.0
        %v1414 = vand.u32 %v373, 4294901760
        %1415 = vmatpush1.msra.mxu0 %v1414
        %1416 = vmatprep.subr.mxu0 0.0
        %v1417 = vand.u32 %v370, 4294901760
        %1418 = vmatpush1.msra.mxu0 %v1417
        %1419 = vmatprep.subr.mxu0 0.0
        %v1420 = vand.u32 %v367, 4294901760
        %1421 = vmatpush1.msra.mxu0 %v1420
        %1422 = vmatprep.subr.mxu0 0.0
        %v1423 = vand.u32 %v364, 4294901760
        %1424 = vmatpush1.msra.mxu0 %v1423
        %1425 = vmatprep.subr.mxu0 0.0
        %1426 = vmatpush2.msra.mxu0 0.0
        %1427 = vmatprep.subr.mxu0 0.0
        %1428 = vmatpush2.msra.mxu0 0.0
        %1429 = vmatprep.subr.mxu0 0.0
        %1430 = vmatpush2.msra.mxu0 0.0
        %1431 = vmatprep.subr.mxu0 0.0
        %1432 = vmatpush2.msra.mxu0 0.0
        %1433 = vmatprep.subr.mxu0 0.0
        %1434 = vmatpush2.msra.mxu0 0.0
        %1435 = vmatprep.subr.mxu0 0.0
        %1436 = vmatpush2.msra.mxu0 0.0
        %1437 = vmatprep.subr.mxu0 0.0
        %1438 = vmatpush2.msra.mxu0 0.0
        %1439 = vmatprep.subr.mxu0 0.0
        %1440 = vmatpush2.msra.mxu0 0.0
        %1441 = vmatprep.subr.mxu0 0.0
        %1442 = vmatpush2.msra.mxu0 0.0
        %1443 = vmatprep.subr.mxu0 0.0
        %1444 = vmatpush2.msra.mxu0 0.0
        %1445 = vmatprep.subr.mxu0 0.0
        %1446 = vmatpush2.msra.mxu0 0.0
        %1447 = vmatprep.subr.mxu0 0.0
        %1448 = vmatpush2.msra.mxu0 0.0
        %1449 = vmatprep.subr.mxu0 0.0
        %1450 = vmatpush2.msra.mxu0 0.0
        %1451 = vmatprep.subr.mxu0 0.0
        %1452 = vmatpush2.msra.mxu0 0.0
        %1453 = vmatprep.subr.mxu0 0.0
        %1454 = vmatpush2.msra.mxu0 0.0
        %1455 = vmatprep.subr.mxu0 0.0
        %1456 = vmatpush2.msra.mxu0 0.0
        %1457 = vmatprep.mubr.f32.mxu0 0.0
        %v1458 = vand.u32 %v385, 4294901760
        %1459 = vmatmul.mubr.f32.gmra.mxu0 %v1458
        %v1460 = vpop.f32.mrf.mxu0
        %v1461 = vadd.f32 %v1385, %v1460
        %v1462 = vpop.f32.mrf.mxu0
        %1463 = vdwg.mxu0
        %1464 = vst [vmem:[%s186] sm:$0xff] %v962
        %1465 = vst [vmem:[%s186 + $0x8] sm:$0xff] %v964
        %vm1466 = vcmask 261120
        %1467 = vst.msk [vmem:[%s186 + $0x10] sm:$0xff] %vm1466, %v1461
        %s1468 = sand.u32 %s96, 1
        %s1469 = scalar_lea.sflag [#allocation5], %s1468
        %s1470 = sand.u32 %s96, 1
        %s1471 = smul.addr %s1470, 24
        %s1472 = scalar_lea.vmem [#allocation6], %s1471
        // Predicated region
        $region37: #{tpu_custom_call.1} parent=31 // pred_check
          %p1473 = pneg %p106
        $region38: #{tpu_custom_call.1} parent=31 // pred_check_branch
          %1475 = sbr.rel (%p1473) target = $region40
        $region39: #{tpu_custom_call.1} parent=31 // pred_region
          %s1477 = ssub.s32 384, 384
          %1478 = vsyncadd %s1469, %s1477
          %s1479 = smul.addr %s20, 3
          %s1480 = smul.addr %s1479, 128
          %s1481 = scalar_lea.hbm %s3, %s1480
          %s1483 = sshll.u32 %s1472, 4
          %s1484 = int_to_ptr.vmem [resolvable:$true] %s1483
          %1486 = dma.vmem_to_hbm [thread:$0]  %s1484, 384, %s1481, %s1469
        $region40: #{tpu_custom_call.1} parent=31 // pred_fallthru
          _
      $region32: #{tpu_custom_call.1} parent=5 // pred_fallthru
        _
      %p1487 = scmp.le.s32.totalorder 2, %s15
      // Predicated region
      $region41: #{tpu_custom_call.1} parent=5 // pred_check
        %p1488 = pneg %p1487
      $region42: #{tpu_custom_call.1} parent=5 // pred_check_branch
        %1490 = sbr.rel (%p1488) target = $region44
      $region43: #{tpu_custom_call.1} parent=5 // pred_region
        %s1491 = ssub.s32 %s15, 2
        // Predicated region
        $region45: #{tpu_custom_call.1} parent=43 // pred_check
          %p1492 = pneg %p112
        $region46: #{tpu_custom_call.1} parent=43 // pred_check_branch
          %1494 = sbr.rel (%p1492) target = $region48
        $region47: #{tpu_custom_call.1} parent=43 // pred_region
          %s1495 = sand.u32 %s97, 1
          %s1496 = scalar_lea.sflag [#allocation5], %s1495
          %s1497 = sand.u32 %s97, 1
          %s1498 = smul.addr %s1497, 24
          %s1499 = scalar_lea.vmem [#allocation6], %s1498
          %1500 = dma.done %s1496, 384
        $region48: #{tpu_custom_call.1} parent=43 // pred_fallthru
          _
      $region44: #{tpu_custom_call.1} parent=5 // pred_fallthru
        _
    $region6: #{tpu_custom_call.1} parent=1 // loop_footer
      %s19 = sadd.s32 1, %s15
    $region7: #{tpu_custom_call.1} parent=1 // loop_footer_branch
      %14 = sbr.rel target = $region3
    $region8: #{tpu_custom_call.1} parent=1 // loop_exit
      _
    %1501 = vsyncpa [#allocation4], 1
    %s1502 = scalar_lea.sflag [#allocation4], 1
    %1503 = vsyncpa %s1502, 1
    %1504 = vsyncpa [#allocation5], 1
    %s1505 = scalar_lea.sflag [#allocation5], 1
    %1506 = vsyncpa %s1505, 1

</llo_original>
